<compile_context>
chip_gen: v7x
topology: tpu7x:2x2x1
jax: 0.10.0
libtpu: 0.0.40
codegen_flags: <defaults>
</compile_context>

<pallas_src>
import functools

import jax
import jax.numpy as jnp
from jax import lax
from jax.experimental import pallas as pl
from jax.experimental.pallas import tpu as pltpu


# ---------------------------------------------------------------------------
# In-kernel fused conv (row shifts only; column shifts pre-stacked by wrapper)
# ---------------------------------------------------------------------------
def _conv_fm(xp_ref, cw_ref, cb_ref, H, W):
    """3x3 / stride-1 / pad-1 conv + bias + ReLU.

    xp_ref : (1, H*W + 2*W, 3*Cin)  per-image input; channel c' = kw*Cin + cin
             holds pixel (h, w + kw - 1) (zero outside the row); the flat axis
             is zero padded by W rows on each side so the three kh shifts are
             exact static slices -- no boundary masks.
    cw_ref : (3, 3*Cin, Cout)       conv taps regrouped per kh
    cb_ref : (1, Cout)              bias (f32)
    returns (H*W, Cout) float32 post-ReLU feature map.
    """
    HW = H * W
    acc = jnp.dot(xp_ref[0, pl.ds(0, HW), :], cw_ref[0],
                  preferred_element_type=jnp.float32)
    acc = acc + jnp.dot(xp_ref[0, pl.ds(W, HW), :], cw_ref[1],
                        preferred_element_type=jnp.float32)
    acc = acc + jnp.dot(xp_ref[0, pl.ds(2 * W, HW), :], cw_ref[2],
                        preferred_element_type=jnp.float32)
    return jnp.maximum(acc + cb_ref[...], 0.0)


# ---------------------------------------------------------------------------
# Fused backbone kernels (one launch per forward; grid=(B,) "parallel")
# ---------------------------------------------------------------------------
def _backbone_train_kernel(xp_ref, cw_ref, cb_ref, pw_ref, pwt_ref, w2_ref,
                           hw_ref, hcw_ref, hb_ref,
                           vec_ref, upd_ref, am_ref,
                           *, H, W, num_parts, use_c):
    """conv + pool + part assignment + collect_weight partials + heads."""
    HW = H * W
    inv_hw = 1.0 / HW

    fm = _conv_fm(xp_ref, cw_ref, cb_ref, H, W)             # (HW, C) f32
    emb = jnp.sum(fm, axis=0, keepdims=True) * inv_hw       # (1, C)  f32

    # ---- part assignment: softmax_p(-||fm - w_p||^2) ----
    # ||fm||^2 is constant per row and cancels in the softmax; ||w||^2 is a
    # grid-invariant constant precomputed in the wrapper.
    s = jnp.dot(fm.astype(pwt_ref.dtype), pwt_ref[...],
                preferred_element_type=jnp.float32)          # (HW, P)
    logits = 2.0 * s - w2_ref[...]
    m = jnp.max(logits, axis=-1, keepdims=True)
    e = jnp.exp(logits - m)
    a = e / jnp.sum(e, axis=-1, keepdims=True)
    # hard threshold, no renormalisation (matches the PyTorch reference)
    a = jnp.where(a < 1.0 / num_parts, 0.0, a)

    # assign summed over HW.  PyTorch collect_weight thresholds this per-part
    # SUM (further summed over the batch) against 1.0 -- it is named
    # `assign_mean` there but is a sum; we keep the sum semantics.
    asum = jnp.sum(a, axis=0, keepdims=True)                 # (1, P)
    am_ref[0] = asum

    # c = relu(einsum('bn,nc->bnc', assign.mean(1), w).mean(1))
    c = jnp.maximum(
        jnp.dot(asum * (inv_hw / num_parts), pw_ref[...].astype(jnp.float32),
                preferred_element_type=jnp.float32), 0.0)    # (1, C)

    # ---- heads: one lane-dense slab [rawcls | hash | 0-pad] ----
    heads = jnp.dot(emb.astype(hw_ref.dtype), hw_ref[...],
                    preferred_element_type=jnp.float32)      # (1, 128)
    if use_c:                                                # epoch > 2 (static)
        heads = heads + jnp.dot(c.astype(hcw_ref.dtype), hcw_ref[...],
                                preferred_element_type=jnp.float32)
    vec_ref[0] = heads + hb_ref[...]                         # 1 unmasked store

    # ---- collect_weight partials: upd[p,c] = sum_q a[q,p] * fm[q,c] ----
    # Single MXU TN contraction over HW, one full-tile store.
    upd_ref[0] = lax.dot_general(a, fm, (((0,), (0,)), ((), ())),
                                 preferred_element_type=jnp.float32)


def _backbone_eval_kernel(xp_ref, cw_ref, cb_ref, hw_ref, hb_ref, vec_ref,
                          *, H, W):
    """Eval path: conv + pool + head slab (hash columns used), one launch."""
    fm = _conv_fm(xp_ref, cw_ref, cb_ref, H, W)
    emb = jnp.sum(fm, axis=0, keepdims=True) * (1.0 / (H * W))
    vec_ref[0] = (jnp.dot(emb.astype(hw_ref.dtype), hw_ref[...],
                          preferred_element_type=jnp.float32) + hb_ref[...])


# ---------------------------------------------------------------------------
# MainNet in JAX / Pallas
# ---------------------------------------------------------------------------
class MainNetPallas:
    def __init__(self, num_classes, num_parts, bit, ratio,
                 channels=64, in_channels=3, compute_dtype=jnp.bfloat16, seed=0):
        self.num_classes = num_classes
        self.num_parts = num_parts
        self.channels = channels
        self.in_channels = in_channels
        self.ratio = ratio
        self.bit = bit
        self.compute_dtype = compute_dtype
        # head-slab lane width: multiple of 128 so the head store is unmasked
        self.head_lanes = max(128, -(-(num_classes + bit) // 128) * 128)

        ks = jax.random.split(jax.random.PRNGKey(seed), 8)

        def linear_init(kk, fan_in, fan_out):
            bound = 1.0 / float(fan_in) ** 0.5
            k1, k2 = jax.random.split(kk)
            w = jax.random.uniform(k1, (fan_in, fan_out), jnp.float32, -bound, bound)
            b = jax.random.uniform(k2, (fan_out,), jnp.float32, -bound, bound)
            return w, b

        # backbone stand-in: one 3x3 conv + ReLU, GAP is the embedding
        self.conv_w = 0.1 * jax.random.normal(
            ks[0], (channels, in_channels, 3, 3), jnp.float32)
        self.conv_b = jnp.zeros((channels,), jnp.float32)

        self.rawcls_w, self.rawcls_b = linear_init(ks[1], channels * 2, num_classes)
        self.hash_w, self.hash_b = linear_init(ks[2], channels, bit)
        self.hashcls_w, self.hashcls_b = linear_init(ks[3], bit, num_classes)

        # self.w = torch.randn(P, C).clamp_(min=0)
        self.w = jnp.maximum(
            jax.random.normal(ks[4], (num_parts, channels), jnp.float32), 0.0)
        self.w_ep_sum = self.w
        self.w_ep_num = jnp.ones((num_parts,), jnp.float32)
        self._bni_key = ks[5]

        # ----- constant kernel operands, packed/cast once -----
        # conv taps regrouped per kh:  taps[kh, kw*Cin + cin, cout]
        self._wtaps = jnp.transpose(self.conv_w, (2, 3, 1, 0)).reshape(
            3, 3 * in_channels, channels).astype(compute_dtype)
        self._cb2d = self.conv_b.reshape(1, channels)
        # lane-dense head slabs: columns [0:ncls) = rawcls, [ncls:ncls+bit) = hash
        L = self.head_lanes
        hw = jnp.zeros((channels, L), jnp.float32)
        hw = hw.at[:, :num_classes].set(self.rawcls_w[:channels])
        hw = hw.at[:, num_classes:num_classes + bit].set(self.hash_w)
        self._heads_w = hw.astype(compute_dtype)
        hcw = jnp.zeros((channels, L), jnp.float32)
        hcw = hcw.at[:, :num_classes].set(self.rawcls_w[channels:])
        self._heads_c_w = hcw.astype(compute_dtype)
        hb = jnp.zeros((1, L), jnp.float32)
        hb = hb.at[0, :num_classes].set(self.rawcls_b)
        hb = hb.at[0, num_classes:num_classes + bit].set(self.hash_b)
        self._heads_b = hb

        self._refresh_part_weights()

    def _refresh_part_weights(self):
        """Re-pack part-weight operands after self.w changes (init / cal_w)."""
        pw = self.w.astype(self.compute_dtype)              # (P, C)
        self._pw = pw
        self._pwt = pw.T                                     # (C, P) MXU-native
        w32 = pw.astype(jnp.float32)
        self._w2 = jnp.sum(w32 * w32, axis=1).reshape(1, self.num_parts)

    # ----- input packing: column-im2col + flat row padding -----
    def _pad_input(self, x):
        """NCHW -> (B, H*W + 2*W, 3*Cin) bf16 for the fused conv.

        Channel c' = kw*Cin + cin holds pixel (h, w + kw - 1) (zero outside the
        row); the flat axis is padded by W zero rows on each side so the
        kernel's three kh shifts are exact, mask-free static slices.
        """
        B, Cin, H, W = x.shape
        xn = jnp.transpose(x, (0, 2, 3, 1))                        # (B,H,W,Cin)
        xw = jnp.pad(xn, ((0, 0), (0, 0), (1, 1), (0, 0)))         # (B,H,W+2,Cin)
        xc = jnp.concatenate([xw[:, :, kw:kw + W, :] for kw in range(3)],
                             axis=-1)                               # (B,H,W,3Cin)
        xf = xc.reshape(B, H * W, 3 * Cin)
        return jnp.pad(xf, ((0, 0), (W, W), (0, 0))).astype(self.compute_dtype)

    # ----- fused train launch -----
    def _run_train(self, xpad, H, W, use_c):
        B, HWp, Cin3 = xpad.shape
        C, P, L = self.channels, self.num_parts, self.head_lanes
        kern = functools.partial(_backbone_train_kernel, H=H, W=W,
                                 num_parts=P, use_c=use_c)
        vec, upd, asum = pl.pallas_call(
            kern,
            out_shape=(
                jax.ShapeDtypeStruct((B, 1, L), jnp.float32),
                jax.ShapeDtypeStruct((B, P, C), jnp.float32),
                jax.ShapeDtypeStruct((B, 1, P), jnp.float32),
            ),
            grid=(B,),
            in_specs=[
                pl.BlockSpec((1, HWp, Cin3), lambda b: (b, 0, 0)),
                pl.BlockSpec((3, Cin3, C), lambda b: (0, 0, 0)),
                pl.BlockSpec((1, C), lambda b: (0, 0)),
                pl.BlockSpec((P, C), lambda b: (0, 0)),
                pl.BlockSpec((C, P), lambda b: (0, 0)),
                pl.BlockSpec((1, P), lambda b: (0, 0)),
                pl.BlockSpec((C, L), lambda b: (0, 0)),
                pl.BlockSpec((C, L), lambda b: (0, 0)),
                pl.BlockSpec((1, L), lambda b: (0, 0)),
            ],
            out_specs=(
                pl.BlockSpec((1, 1, L), lambda b: (b, 0, 0)),
                pl.BlockSpec((1, P, C), lambda b: (b, 0, 0)),
                pl.BlockSpec((1, 1, P), lambda b: (b, 0, 0)),
            ),
            compiler_params=pltpu.CompilerParams(
                dimension_semantics=("parallel",)),
        )(xpad, self._wtaps, self._cb2d, self._pw, self._pwt, self._w2,
          self._heads_w, self._heads_c_w, self._heads_b)
        ncls, bit = self.num_classes, self.bit
        y_hat = vec[:, 0, :ncls]
        hash_code = vec[:, 0, ncls:ncls + bit]
        return y_hat, hash_code, upd, asum.reshape(B, P)

    # ----- fused eval launch -----
    def _run_eval(self, xpad, H, W):
        B, HWp, Cin3 = xpad.shape
        C, L = self.channels, self.head_lanes
        kern = functools.partial(_backbone_eval_kernel, H=H, W=W)
        vec = pl.pallas_call(
            kern,
            out_shape=jax.ShapeDtypeStruct((B, 1, L), jnp.float32),
            grid=(B,),
            in_specs=[
                pl.BlockSpec((1, HWp, Cin3), lambda b: (b, 0, 0)),
                pl.BlockSpec((3, Cin3, C), lambda b: (0, 0, 0)),
                pl.BlockSpec((1, C), lambda b: (0, 0)),
                pl.BlockSpec((C, L), lambda b: (0, 0)),
                pl.BlockSpec((1, L), lambda b: (0, 0)),
            ],
            out_specs=pl.BlockSpec((1, 1, L), lambda b: (b, 0, 0)),
            compiler_params=pltpu.CompilerParams(
                dimension_semantics=("parallel",)),
        )(xpad, self._wtaps, self._cb2d, self._heads_w, self._heads_b)
        ncls = self.num_classes
        return vec[:, 0, ncls:ncls + self.bit]

    # ----- BNI (bit-noise injection): glue randomness, plain JAX -----
    def BNI(self, x, key):
        batch_size, bit = x.shape
        l = int(bit * self.ratio)
        num_b = batch_size * l
        x = x / (1.0 - self.ratio)
        if num_b % 2 != 0:
            l = l - 1
            num_b = batch_size * l
        kp, kr = jax.random.split(key)
        base = jnp.concatenate([-jnp.ones((num_b // 2,), x.dtype),
                                jnp.ones((num_b - num_b // 2,), x.dtype)])
        noise_b = jax.random.permutation(kp, base).reshape(batch_size, l)
        row_keys = jax.random.split(kr, batch_size)

        def _inject(xi, ki, ni):
            idx = jax.random.permutation(ki, bit)[:l]
            return xi.at[idx].set(ni)

        return jax.vmap(_inject)(x, row_keys, noise_b)

    # ----- stateful buffer updates (plain attribute state, not jitted) -----
    def collect_weight(self, upd, asum):
        update_w = jnp.sum(upd, axis=0)                 # (P, C)
        assign_sum = jnp.sum(asum, axis=0)              # (P,) = assign.sum(1).sum(0)
        cond = assign_sum > 1.0
        self.w_ep_sum = jnp.where(cond[:, None], self.w_ep_sum + update_w,
                                  self.w_ep_sum)
        self.w_ep_num = jnp.where(cond, self.w_ep_num + assign_sum,
                                  self.w_ep_num)

    def cal_w(self):
        ok = self.w_ep_num > 0
        self.w_ep_sum = jnp.where(ok[:, None],
                                  self.w_ep_sum / self.w_ep_num[:, None],
                                  self.w_ep_sum)
        self.w = self.w_ep_sum
        self.w_ep_num = jnp.ones((self.num_parts,), jnp.float32)
        self._refresh_part_weights()

    # ----- forward -----
    def forward(self, x, epoch=0, is_train=False):
        B, Cin, H, W = x.shape
        xpad = self._pad_input(x)
        if is_train:
            y_hat, hash_code, upd, asum = self._run_train(
                xpad, H, W, bool(epoch > 2))
            self.collect_weight(upd, asum)
            self._bni_key, sub = jax.random.split(self._bni_key)
            noisy = self.BNI(hash_code, sub)
            # hash_cls is a (B, bit) @ (bit, ncls) matmul: left to XLA so it
            # fuses with the BNI glue (a separate pallas_call was pure launch
            # overhead).
            y_hat_hash = noisy @ self.hashcls_w + self.hashcls_b
            return y_hat, y_hat_hash, hash_code
        else:
            return self._run_eval(xpad, H, W)


# ---------------------------------------------------------------------------
# Pure-JAX reference (for in-script numerical validation of the kernels)
# ---------------------------------------------------------------------------
def _ref_backbone(net, x):
    cdt = net.compute_dtype
    xn = jnp.transpose(x, (0, 2, 3, 1)).astype(cdt)
    wh = jnp.transpose(net.conv_w, (2, 3, 1, 0)).astype(cdt)     # HWIO
    fm = lax.conv_general_dilated(
        xn, wh, window_strides=(1, 1), padding="SAME",
        dimension_numbers=("NHWC", "HWIO", "NHWC"),
        preferred_element_type=jnp.float32)
    fm = jnp.maximum(fm + net.conv_b[None, None, None, :], 0.0)   # (B,H,W,C)
    emb = jnp.mean(fm, axis=(1, 2))                               # (B,C)
    return fm, emb


def _ref_train_yhat(net, fm, emb, epoch):
    B, H, W, C = fm.shape
    P = net.num_parts
    cdt = net.compute_dtype
    fmf = fm.reshape(B, H * W, C)
    wq = net.w.astype(cdt).astype(jnp.float32)                    # mirror bf16 cast
    s = jnp.einsum("bqc,pc->bqp", fmf.astype(cdt).astype(jnp.float32), wq)
    d = (jnp.sum(fmf * fmf, axis=-1, keepdims=True)
         + jnp.sum(wq * wq, axis=-1)[None, None, :] - 2.0 * s)
    a = jax.nn.softmax(-d, axis=-1)
    a = jnp.where(a < 1.0 / P, 0.0, a)
    asum = jnp.mean(a, axis=1)                                    # (B,P)
    c = jnp.maximum(asum @ wq / P, 0.0)
    emb_cat = jnp.concatenate(
        [emb, c if epoch > 2 else jnp.zeros_like(emb)], axis=-1)
    return emb_cat @ net.rawcls_w + net.rawcls_b


# ---------------------------------------------------------------------------
if __name__ == "__main__":
    key = jax.random.PRNGKey(0)
    B, Cin, H, W = 2, 3, 16, 16
    x = jax.random.normal(key, (B, Cin, H, W), jnp.float32)

    net = MainNetPallas(num_classes=10, num_parts=8, bit=32, ratio=0.25,
                        channels=64, in_channels=Cin, seed=0)

    # ----- eval path: one fused conv+pool+heads launch -----
    hash_code = net.forward(x)
    jax.block_until_ready(hash_code)
    assert hash_code.shape == (B, 32)

    ref_fm, ref_emb = _ref_backbone(net, x)
    ref_hash = ref_emb @ net.hash_w + net.hash_b
    assert jnp.allclose(hash_code, ref_hash, atol=1e-2, rtol=1e-2), \
        "eval hash_code mismatch vs reference"

    # ----- train path: fused backbone kernel + BNI + hash_cls (plain JAX) -----
    y_hat, y_hat_hash, hc = net.forward(x, epoch=3, is_train=True)
    jax.block_until_ready((y_hat, y_hat_hash, hc))
    assert y_hat.shape == (B, 10) and y_hat_hash.shape == (B, 10)
    assert hc.shape == (B, 32)
    assert jnp.allclose(hc, ref_hash, atol=1e-2, rtol=1e-2), \
        "train hash_code mismatch vs reference"

    ref_y = _ref_train_yhat(net, ref_fm, ref_emb, epoch=3)
    assert jnp.allclose(y_hat, ref_y, atol=3e-2, rtol=3e-2), \
        "train y_hat mismatch vs reference"

    print("KERNEL_OK")
</pallas_src>

<mosaic_0001>
module attributes {stable_mosaic.version = 11 : i64} {
  func.func @_backbone_eval_kernel(%arg0: i32, %arg1: memref<1x288x9xbf16, #tpu.memory_space<vmem>>, %arg2: memref<3x9x64xbf16, #tpu.memory_space<vmem>>, %arg3: memref<1x64xf32, #tpu.memory_space<vmem>>, %arg4: memref<64x128xbf16, #tpu.memory_space<vmem>>, %arg5: memref<1x128xf32, #tpu.memory_space<vmem>>, %arg6: memref<1x1x128xf32, #tpu.memory_space<vmem>>) attributes {dimension_semantics = [#tpu.dimension_semantics<parallel>], iteration_bounds = array<i64: 2>, scalar_prefetch = 0 : i64, scratch_operands = 0 : i64, tpu.core_type = #tpu.core_type<tc>, window_params = [{transform_indices = @transform_0, window_bounds = array<i64: 1, 288, 9>}, {pipeline_mode = #tpu.pipeline_mode<synchronous>, transform_indices = @transform_1, window_bounds = array<i64: 3, 9, 64>}, {pipeline_mode = #tpu.pipeline_mode<synchronous>, transform_indices = @transform_2, window_bounds = array<i64: 1, 64>}, {pipeline_mode = #tpu.pipeline_mode<synchronous>, transform_indices = @transform_3, window_bounds = array<i64: 64, 128>}, {pipeline_mode = #tpu.pipeline_mode<synchronous>, transform_indices = @transform_4, window_bounds = array<i64: 1, 128>}, {transform_indices = @transform_5, window_bounds = array<i64: 1, 1, 128>}]} {
    %c0 = arith.constant 0 : index
    %c0_0 = arith.constant 0 : index
    %c0_1 = arith.constant 0 : index
    %0 = vector.load %arg1[%c0, %c0_0, %c0_1] : memref<1x288x9xbf16, #tpu.memory_space<vmem>>, vector<1x256x9xbf16>
    %1 = vector.shape_cast %0 : vector<1x256x9xbf16> to vector<256x9xbf16>
    %c0_2 = arith.constant 0 : index
    %c0_3 = arith.constant 0 : index
    %c0_4 = arith.constant 0 : index
    %2 = vector.load %arg2[%c0_2, %c0_3, %c0_4] : memref<3x9x64xbf16, #tpu.memory_space<vmem>>, vector<1x9x64xbf16>
    %3 = vector.shape_cast %2 : vector<1x9x64xbf16> to vector<9x64xbf16>
    %cst = arith.constant dense<0.000000e+00> : vector<256x64xf32>
    %4 = tpu.matmul %1, %3, %cst {dimension_numbers = #tpu.dot_dimension_numbers<[1], [0], [0], [1], [0, 0, 1, 1], [], []>} : vector<256x9xbf16>, vector<9x64xbf16>, vector<256x64xf32> -> vector<256x64xf32>
    %c0_5 = arith.constant 0 : index
    %c16 = arith.constant 16 : index
    %c0_6 = arith.constant 0 : index
    %5 = vector.load %arg1[%c0_5, %c16, %c0_6] : memref<1x288x9xbf16, #tpu.memory_space<vmem>>, vector<1x256x9xbf16>
    %6 = vector.shape_cast %5 : vector<1x256x9xbf16> to vector<256x9xbf16>
    %c1 = arith.constant 1 : index
    %c0_7 = arith.constant 0 : index
    %c0_8 = arith.constant 0 : index
    %7 = vector.load %arg2[%c1, %c0_7, %c0_8] : memref<3x9x64xbf16, #tpu.memory_space<vmem>>, vector<1x9x64xbf16>
    %8 = vector.shape_cast %7 : vector<1x9x64xbf16> to vector<9x64xbf16>
    %cst_9 = arith.constant dense<0.000000e+00> : vector<256x64xf32>
    %9 = tpu.matmul %6, %8, %cst_9 {dimension_numbers = #tpu.dot_dimension_numbers<[1], [0], [0], [1], [0, 0, 1, 1], [], []>} : vector<256x9xbf16>, vector<9x64xbf16>, vector<256x64xf32> -> vector<256x64xf32>
    %10 = arith.addf %4, %9 : vector<256x64xf32>
    %c0_10 = arith.constant 0 : index
    %c32 = arith.constant 32 : index
    %c0_11 = arith.constant 0 : index
    %11 = vector.load %arg1[%c0_10, %c32, %c0_11] : memref<1x288x9xbf16, #tpu.memory_space<vmem>>, vector<1x256x9xbf16>
    %12 = vector.shape_cast %11 : vector<1x256x9xbf16> to vector<256x9xbf16>
    %c2 = arith.constant 2 : index
    %c0_12 = arith.constant 0 : index
    %c0_13 = arith.constant 0 : index
    %13 = vector.load %arg2[%c2, %c0_12, %c0_13] : memref<3x9x64xbf16, #tpu.memory_space<vmem>>, vector<1x9x64xbf16>
    %14 = vector.shape_cast %13 : vector<1x9x64xbf16> to vector<9x64xbf16>
    %cst_14 = arith.constant dense<0.000000e+00> : vector<256x64xf32>
    %15 = tpu.matmul %12, %14, %cst_14 {dimension_numbers = #tpu.dot_dimension_numbers<[1], [0], [0], [1], [0, 0, 1, 1], [], []>} : vector<256x9xbf16>, vector<9x64xbf16>, vector<256x64xf32> -> vector<256x64xf32>
    %16 = arith.addf %10, %15 : vector<256x64xf32>
    %c0_15 = arith.constant 0 : index
    %c0_16 = arith.constant 0 : index
    %17 = vector.load %arg3[%c0_15, %c0_16] : memref<1x64xf32, #tpu.memory_space<vmem>>, vector<1x64xf32>
    %18 = vector.broadcast %17 : vector<1x64xf32> to vector<256x64xf32>
    %19 = arith.addf %16, %18 : vector<256x64xf32>
    %cst_17 = arith.constant 0.000000e+00 : f32
    %20 = vector.broadcast %cst_17 : f32 to vector<256x64xf32>
    %21 = arith.maximumf %19, %20 : vector<256x64xf32>
    %cst_18 = arith.constant dense<0.000000e+00> : vector<64xf32>
    %22 = vector.multi_reduction <add>, %21, %cst_18 [0] : vector<256x64xf32> to vector<64xf32>
    %23 = vector.shape_cast %22 : vector<64xf32> to vector<1x64xf32>
    %cst_19 = arith.constant 3.906250e-03 : f32
    %24 = vector.broadcast %cst_19 : f32 to vector<1x64xf32>
    %25 = arith.mulf %23, %24 : vector<1x64xf32>
    %26 = arith.truncf %25 : vector<1x64xf32> to vector<1x64xbf16>
    %c0_20 = arith.constant 0 : index
    %c0_21 = arith.constant 0 : index
    %27 = vector.load %arg4[%c0_20, %c0_21] : memref<64x128xbf16, #tpu.memory_space<vmem>>, vector<64x128xbf16>
    %cst_22 = arith.constant dense<0.000000e+00> : vector<1x128xf32>
    %28 = tpu.matmul %26, %27, %cst_22 {dimension_numbers = #tpu.dot_dimension_numbers<[1], [0], [0], [1], [0, 0, 1, 1], [], []>} : vector<1x64xbf16>, vector<64x128xbf16>, vector<1x128xf32> -> vector<1x128xf32>
    %c0_23 = arith.constant 0 : index
    %c0_24 = arith.constant 0 : index
    %29 = vector.load %arg5[%c0_23, %c0_24] : memref<1x128xf32, #tpu.memory_space<vmem>>, vector<1x128xf32>
    %30 = arith.addf %28, %29 : vector<1x128xf32>
    %c0_25 = arith.constant 0 : index
    %c0_26 = arith.constant 0 : index
    %c0_27 = arith.constant 0 : index
    %31 = vector.load %arg6[%c0_25, %c0_26, %c0_27] : memref<1x1x128xf32, #tpu.memory_space<vmem>>, vector<1x1x128xf32>
    %32 = vector.shape_cast %31 : vector<1x1x128xf32> to vector<1x128xf32>
    %33 = vector.shape_cast %30 : vector<1x128xf32> to vector<1x1x128xf32>
    tpu.vector_store %arg6[%c0_25, %c0_26, %c0_27], %33 {strides = array<i32>} : memref<1x1x128xf32, #tpu.memory_space<vmem>>, vector<1x1x128xf32>,
    return
  }
  func.func @transform_0(%arg0: i32) -> (i32, i32, i32) {
    %c0_i32 = arith.constant 0 : i32
    %c0_i32_0 = arith.constant 0 : i32
    %c0_i32_1 = arith.constant 0 : i32
    return %arg0, %c0_i32, %c0_i32_0 : i32, i32, i32
  }
  func.func @transform_1(%arg0: i32) -> (i32, i32, i32) {
    %c0_i32 = arith.constant 0 : i32
    %c0_i32_0 = arith.constant 0 : i32
    %c0_i32_1 = arith.constant 0 : i32
    %c0_i32_2 = arith.constant 0 : i32
    return %c0_i32, %c0_i32_0, %c0_i32_1 : i32, i32, i32
  }
  func.func @transform_2(%arg0: i32) -> (i32, i32) {
    %c0_i32 = arith.constant 0 : i32
    %c0_i32_0 = arith.constant 0 : i32
    %c0_i32_1 = arith.constant 0 : i32
    return %c0_i32, %c0_i32_0 : i32, i32
  }
  func.func @transform_3(%arg0: i32) -> (i32, i32) {
    %c0_i32 = arith.constant 0 : i32
    %c0_i32_0 = arith.constant 0 : i32
    %c0_i32_1 = arith.constant 0 : i32
    return %c0_i32, %c0_i32_0 : i32, i32
  }
  func.func @transform_4(%arg0: i32) -> (i32, i32) {
    %c0_i32 = arith.constant 0 : i32
    %c0_i32_0 = arith.constant 0 : i32
    %c0_i32_1 = arith.constant 0 : i32
    return %c0_i32, %c0_i32_0 : i32, i32
  }
  func.func @transform_5(%arg0: i32) -> (i32, i32, i32) {
    %c0_i32 = arith.constant 0 : i32
    %c0_i32_0 = arith.constant 0 : i32
    %c0_i32_1 = arith.constant 0 : i32
    return %arg0, %c0_i32, %c0_i32_0 : i32, i32, i32
  }
}

</mosaic_0001>

<llo_original>
// kernel: tpu_custom_call.1
$region0: #{tpu_custom_call.1}
  #allocation0 [shape = 'u32[]', space=smem, size = 0x4, offset = 0x4, fixed_abs, tag = 'smem constant byte address 0x4 - core index']
  #allocation1 [shape = 'u32[144,128]{1,0:T(1,128)}', space=vmem, size = 0x12000, scoped, tag = 'internal scratch']
  %s0 = inlined_call_operand.vmem [shape: bf16[2,288,9], index: 0, kind: input, shape index: {}]
  %s1 = inlined_call_operand.vmem [shape: bf16[3,9,64], index: 1, kind: input, shape index: {}]
  %s2 = inlined_call_operand.vmem [shape: f32[1,64], index: 2, kind: input, shape index: {}]
  %s3 = inlined_call_operand.vmem [shape: bf16[64,128], index: 3, kind: input, shape index: {}]
  %s4 = inlined_call_operand.vmem [shape: f32[1,128], index: 4, kind: input, shape index: {}]
  %s5 = inlined_call_operand.hbm [shape: f32[2,1,128], index: 5, kind: output, shape index: {}]
  %s6 = sld [smem:[#allocation0]]
  $region53: #{tpu_custom_call.1} parent=0
    _
  %s8 = ssub.s32 1, %s6
  %s9 = scalar_select 0, %s8, %s6
  $region1: #{tpu_custom_call.1} parent=0
    #allocation2 [shape = 'u8[1024]{0}', space=vmem, size = 0x400, scoped, tag = 'output window, operand 0']
    #allocation3 [shape = 's32[2]{0}', space=sflag, size = 0x8, scoped, tag = 'scoped memory for tpu_custom_call.1']
    %10 = vsyncpa [#allocation3], 0
    %s11 = scalar_lea.sflag [#allocation3], 1
    %12 = vsyncpa %s11, 0
    loop: start=0, step=1, limit=4
    $region2: #{tpu_custom_call.1} parent=1 // loop_pre_header
      _
    $region3: #{tpu_custom_call.1} parent=1 // loop_header
      %s14 = sphi 0, %s18
      %p15 = scmp.ge.s32.totalorder %s14, 4
      %s24 = sphi 0, %s26
      %s27 = sphi 0, %s24
      %s28 = sphi 0, %s27
      %s44 = sphi 0, %s28
      %s48 = sphi 0, %s48
      %s50 = sphi 0, %s48
      %s51 = sphi 0, %s50
      %s65 = sphi 0, %s51
      %s69 = sphi 0, %s69
      %s71 = sphi 0, %s69
      %s72 = sphi 0, %s71
      %s86 = sphi 0, %s72
      %s90 = sphi 0, %s90
      %s92 = sphi 0, %s90
      %s93 = sphi 0, %s92
      %s107 = sphi 0, %s93
      %s111 = sphi 0, %s111
      %s113 = sphi 0, %s111
      %s114 = sphi 0, %s113
      %s128 = sphi 0, %s114
      %s134 = sphi 0, %s136
      %s137 = sphi 0, %s134
      %s138 = sphi 0, %s137
      %s154 = sphi 0, %s138
    $region4: #{tpu_custom_call.1} parent=1 // loop_header_branch
      %17 = sbr.rel (%p15) target = $region8
    $region5: #{tpu_custom_call.1} parent=1 // loop_body
      %s19 = ssub.s32 %s14, 1
      %s20 = ssub.s32 %s14, 2
      %s21 = sadd.s32 %s14, 1
      %s22 = ssub.s32 %s14, %s21
      %p23 = scmp.eq.s32.totalorder %s22, 0
      %s25 = sadd.s32 %s24, 1
      %s26 = scalar_select %p23, %s24, %s25
      %p29 = pneg %p23
      %p30 = scmp.eq.s32.totalorder %s14, 1
      %p31 = por %p29, %p30
      %p32 = scmp.ne.s32.totalorder %s24, %s27
      %p33 = scmp.eq.s32.totalorder %s14, 0
      %p34 = por %p32, %p33
      %p35 = scmp.ne.s32.totalorder %s24, %s27
      %p36 = scmp.eq.s32.totalorder %s19, 1
      %p37 = por %p35, %p36
      %p38 = scmp.ne.s32.totalorder %s27, %s28
      %p39 = scmp.eq.s32.totalorder %s19, 0
      %p40 = por %p38, %p39
      %p41 = scmp.ne.s32.totalorder %s27, %s28
      %p42 = scmp.eq.s32.totalorder %s20, 1
      %p43 = por %p41, %p42
      %p45 = scmp.ne.s32.totalorder %s28, %s44
      %p46 = scmp.eq.s32.totalorder %s20, 0
      %p47 = por %p45, %p46
      %s49 = sadd.s32 %s48, 1
      %p52 = scmp.eq.s32.totalorder %s14, 1
      %p53 = scmp.ne.s32.totalorder %s48, %s50
      %p54 = scmp.eq.s32.totalorder %s14, 0
      %p55 = por %p53, %p54
      %p56 = scmp.ne.s32.totalorder %s48, %s50
      %p57 = scmp.eq.s32.totalorder %s19, 1
      %p58 = por %p56, %p57
      %p59 = scmp.ne.s32.totalorder %s50, %s51
      %p60 = scmp.eq.s32.totalorder %s19, 0
      %p61 = por %p59, %p60
      %p62 = scmp.ne.s32.totalorder %s50, %s51
      %p63 = scmp.eq.s32.totalorder %s20, 1
      %p64 = por %p62, %p63
      %p66 = scmp.ne.s32.totalorder %s51, %s65
      %p67 = scmp.eq.s32.totalorder %s20, 0
      %p68 = por %p66, %p67
      %s70 = sadd.s32 %s69, 1
      %p73 = scmp.eq.s32.totalorder %s14, 1
      %p74 = scmp.ne.s32.totalorder %s69, %s71
      %p75 = scmp.eq.s32.totalorder %s14, 0
      %p76 = por %p74, %p75
      %p77 = scmp.ne.s32.totalorder %s69, %s71
      %p78 = scmp.eq.s32.totalorder %s19, 1
      %p79 = por %p77, %p78
      %p80 = scmp.ne.s32.totalorder %s71, %s72
      %p81 = scmp.eq.s32.totalorder %s19, 0
      %p82 = por %p80, %p81
      %p83 = scmp.ne.s32.totalorder %s71, %s72
      %p84 = scmp.eq.s32.totalorder %s20, 1
      %p85 = por %p83, %p84
      %p87 = scmp.ne.s32.totalorder %s72, %s86
      %p88 = scmp.eq.s32.totalorder %s20, 0
      %p89 = por %p87, %p88
      %s91 = sadd.s32 %s90, 1
      %p94 = scmp.eq.s32.totalorder %s14, 1
      %p95 = scmp.ne.s32.totalorder %s90, %s92
      %p96 = scmp.eq.s32.totalorder %s14, 0
      %p97 = por %p95, %p96
      %p98 = scmp.ne.s32.totalorder %s90, %s92
      %p99 = scmp.eq.s32.totalorder %s19, 1
      %p100 = por %p98, %p99
      %p101 = scmp.ne.s32.totalorder %s92, %s93
      %p102 = scmp.eq.s32.totalorder %s19, 0
      %p103 = por %p101, %p102
      %p104 = scmp.ne.s32.totalorder %s92, %s93
      %p105 = scmp.eq.s32.totalorder %s20, 1
      %p106 = por %p104, %p105
      %p108 = scmp.ne.s32.totalorder %s93, %s107
      %p109 = scmp.eq.s32.totalorder %s20, 0
      %p110 = por %p108, %p109
      %s112 = sadd.s32 %s111, 1
      %p115 = scmp.eq.s32.totalorder %s14, 1
      %p116 = scmp.ne.s32.totalorder %s111, %s113
      %p117 = scmp.eq.s32.totalorder %s14, 0
      %p118 = por %p116, %p117
      %p119 = scmp.ne.s32.totalorder %s111, %s113
      %p120 = scmp.eq.s32.totalorder %s19, 1
      %p121 = por %p119, %p120
      %p122 = scmp.ne.s32.totalorder %s113, %s114
      %p123 = scmp.eq.s32.totalorder %s19, 0
      %p124 = por %p122, %p123
      %p125 = scmp.ne.s32.totalorder %s113, %s114
      %p126 = scmp.eq.s32.totalorder %s20, 1
      %p127 = por %p125, %p126
      %p129 = scmp.ne.s32.totalorder %s114, %s128
      %p130 = scmp.eq.s32.totalorder %s20, 0
      %p131 = por %p129, %p130
      %s132 = ssub.s32 %s14, %s21
      %p133 = scmp.eq.s32.totalorder %s132, 0
      %s135 = sadd.s32 %s134, 1
      %s136 = scalar_select %p133, %s134, %s135
      %p139 = pneg %p133
      %p140 = scmp.eq.s32.totalorder %s14, 1
      %p141 = por %p139, %p140
      %p142 = scmp.ne.s32.totalorder %s134, %s137
      %p143 = scmp.eq.s32.totalorder %s14, 0
      %p144 = por %p142, %p143
      %p145 = scmp.ne.s32.totalorder %s134, %s137
      %p146 = scmp.eq.s32.totalorder %s19, 1
      %p147 = por %p145, %p146
      %p148 = scmp.ne.s32.totalorder %s137, %s138
      %p149 = scmp.eq.s32.totalorder %s19, 0
      %p150 = por %p148, %p149
      %p151 = scmp.ne.s32.totalorder %s137, %s138
      %p152 = scmp.eq.s32.totalorder %s20, 1
      %p153 = por %p151, %p152
      %p155 = scmp.ne.s32.totalorder %s138, %s154
      %p156 = scmp.eq.s32.totalorder %s20, 0
      %p157 = por %p155, %p156
      %p158 = scmp.le.s32.totalorder 1, %s14
      %p159 = scmp.lt.s32.totalorder %s14, 3
      %p160 = pnand %p158, %p159
      %p161 = pneg %p160
      // Predicated region
      $region9: #{tpu_custom_call.1} parent=5 // pred_check
        _
      $region10: #{tpu_custom_call.1} parent=5 // pred_check_branch
        %163 = sbr.rel (%p160) target = $region12
      $region11: #{tpu_custom_call.1} parent=5 // pred_region
        %s164 = ssub.s32 %s14, 1
        // Predicated region
        $region13: #{tpu_custom_call.1} parent=11 // pred_check
          %p165 = pneg %p61
        $region14: #{tpu_custom_call.1} parent=11 // pred_check_branch
          %167 = sbr.rel (%p165) target = $region16
        $region15: #{tpu_custom_call.1} parent=11 // pred_region
          _
        $region16: #{tpu_custom_call.1} parent=11 // pred_fallthru
          _
        // Predicated region
        $region17: #{tpu_custom_call.1} parent=11 // pred_check
          %p168 = pneg %p82
        $region18: #{tpu_custom_call.1} parent=11 // pred_check_branch
          %170 = sbr.rel (%p168) target = $region20
        $region19: #{tpu_custom_call.1} parent=11 // pred_region
          _
        $region20: #{tpu_custom_call.1} parent=11 // pred_fallthru
          _
        // Predicated region
        $region21: #{tpu_custom_call.1} parent=11 // pred_check
          %p171 = pneg %p103
        $region22: #{tpu_custom_call.1} parent=11 // pred_check_branch
          %173 = sbr.rel (%p171) target = $region24
        $region23: #{tpu_custom_call.1} parent=11 // pred_region
          _
        $region24: #{tpu_custom_call.1} parent=11 // pred_fallthru
          _
        // Predicated region
        $region25: #{tpu_custom_call.1} parent=11 // pred_check
          %p174 = pneg %p124
        $region26: #{tpu_custom_call.1} parent=11 // pred_check_branch
          %176 = sbr.rel (%p174) target = $region28
        $region27: #{tpu_custom_call.1} parent=11 // pred_region
          _
        $region28: #{tpu_custom_call.1} parent=11 // pred_fallthru
          _
      $region12: #{tpu_custom_call.1} parent=5 // pred_fallthru
        _
      %p177 = scmp.lt.s32.totalorder %s14, 2
      // Predicated region
      $region29: #{tpu_custom_call.1} parent=5 // pred_check
        %p178 = pneg %p177
      $region30: #{tpu_custom_call.1} parent=5 // pred_check_branch
        %180 = sbr.rel (%p178) target = $region32
      $region31: #{tpu_custom_call.1} parent=5 // pred_region
        // Predicated region
        $region33: #{tpu_custom_call.1} parent=31 // pred_check
          %p181 = pneg %p34
        $region34: #{tpu_custom_call.1} parent=31 // pred_check_branch
          %183 = sbr.rel (%p181) target = $region36
        $region35: #{tpu_custom_call.1} parent=31 // pred_region
          %p184 = scmp.lt.s32.totalorder %s14, 1
          %s185 = scalar_select %p184, %s14, 1
          %s186 = smul.addr %s185, 36
          %s187 = smul.addr %s186, 4
          %s188 = scalar_lea.vmem %s0, %s187
        $region36: #{tpu_custom_call.1} parent=31 // pred_fallthru
          _
      $region32: #{tpu_custom_call.1} parent=5 // pred_fallthru
        _
      %p189 = scmp.le.s32.totalorder 1, %s14
      %p190 = scmp.lt.s32.totalorder %s14, 3
      %p191 = pnand %p189, %p190
      %p192 = pneg %p191
      // Predicated region
      $region37: #{tpu_custom_call.1} parent=5 // pred_check
        _
      $region38: #{tpu_custom_call.1} parent=5 // pred_check_branch
        %194 = sbr.rel (%p191) target = $region40
      $region39: #{tpu_custom_call.1} parent=5 // pred_region
        %s195 = ssub.s32 %s14, 1
        %p196 = scmp.lt.s32.totalorder %s19, 1
        %s197 = scalar_select %p196, %s19, 1
        %s198 = smul.addr %s197, 36
        %s199 = smul.addr %s198, 4
        %s200 = scalar_lea.vmem %s0, %s199
        %p201 = pneg %p40
        %p202 = pneg %p37
        %p203 = pneg %p61
        %p204 = pneg %p58
        %p205 = pneg %p82
        %p206 = pneg %p79
        %p207 = pneg %p103
        %p208 = pneg %p100
        %p209 = pneg %p124
        %p210 = pneg %p121
        %p211 = pneg %p150
        %p212 = pneg %p147
        %s213 = sand.u32 %s137, 1
        %s214 = scalar_lea.sflag [#allocation3], %s213
        %s215 = sand.u32 %s137, 1
        %s216 = scalar_lea.vmem [#allocation2], %s215
        %p217 = scmp.lt.s32.totalorder %s19, 1
        %s218 = scalar_select %p217, %s19, 1
        %s219 = smul.addr %s218, 36
        %s220 = smul.addr %s219, 4
        %s221 = scalar_lea.vmem %s0, %s220
        %v223 = vld [vmem:[%s221] sm:$0xf]
        %v224 = vld [vmem:[%s221 + $0x4] sm:$0xf]
        %v225 = vld [vmem:[%s221 + $0x8] sm:$0xf]
        %v226 = vld [vmem:[%s221 + $0xc] sm:$0xf]
        %v227 = vld [vmem:[%s221 + $0x10] sm:$0xf]
        %v228 = vld [vmem:[%s221 + $0x14] sm:$0xf]
        %v229 = vld [vmem:[%s221 + $0x18] sm:$0xf]
        %v230 = vld [vmem:[%s221 + $0x1c] sm:$0xf]
        %v231 = vld [vmem:[%s221 + $0x20] sm:$0xf]
        %v232 = vld [vmem:[%s221 + $0x24] sm:$0xf]
        %v233 = vld [vmem:[%s221 + $0x28] sm:$0xf]
        %v234 = vld [vmem:[%s221 + $0x2c] sm:$0xf]
        %v235 = vld [vmem:[%s221 + $0x30] sm:$0xf]
        %v236 = vld [vmem:[%s221 + $0x34] sm:$0xf]
        %v237 = vld [vmem:[%s221 + $0x38] sm:$0xf]
        %v238 = vld [vmem:[%s221 + $0x3c] sm:$0xf]
        %v239 = vld [vmem:[%s221 + $0x40] sm:$0xf]
        %v240 = vld [vmem:[%s221 + $0x44] sm:$0xf]
        %v241 = vld [vmem:[%s221 + $0x48] sm:$0xf]
        %v242 = vld [vmem:[%s221 + $0x4c] sm:$0xf]
        %v243 = vld [vmem:[%s221 + $0x50] sm:$0xf]
        %v244 = vld [vmem:[%s221 + $0x54] sm:$0xf]
        %v245 = vld [vmem:[%s221 + $0x58] sm:$0xf]
        %v246 = vld [vmem:[%s221 + $0x5c] sm:$0xf]
        %v247 = vld [vmem:[%s221 + $0x60] sm:$0xf]
        %v248 = vld [vmem:[%s221 + $0x64] sm:$0xf]
        %v249 = vld [vmem:[%s221 + $0x68] sm:$0xf]
        %v250 = vld [vmem:[%s221 + $0x6c] sm:$0xf]
        %v251 = vld [vmem:[%s221 + $0x70] sm:$0xf]
        %v252 = vld [vmem:[%s221 + $0x74] sm:$0xf]
        %v253 = vld [vmem:[%s221 + $0x78] sm:$0xf]
        %v254 = vld [vmem:[%s221 + $0x7c] sm:$0xf]
        %v255 = vld [vmem:[%s1] sm:$0xf]
        %v256 = vld [vmem:[%s1 + $0x4] sm:$0x1]
        %v257 = vld [vmem:[%s221 + $0x80] sm:$0xf]
        %v258 = vld [vmem:[%s221 + $0x84] sm:$0xf]
        %s259 = scalar_lea.vmem %s1, 8
        %v260 = vld [vmem:[%s259] sm:$0xf]
        %v261 = vld [vmem:[%s259 + $0x4] sm:$0x1]
        %v294 = vunpack.c.l.b16 %v225
        %v295 = vunpack.c.l.b16 %v226
        %v296 = vunpack.c.l.b16 %v227
        %v297 = vunpack.c.l.b16 %v228
        %v298 = vunpack.c.l.b16 %v229
        %v299 = vunpack.c.l.b16 %v230
        %v300 = vunpack.c.l.b16 %v231
        %v301 = vunpack.c.l.b16 %v232
        %v302 = vunpack.c.l.b16 %v233
        %v303 = vunpack.c.l.b16 %v234
        %v304 = vunpack.c.l.b16 %v235
        %v305 = vunpack.c.l.b16 %v236
        %v306 = vunpack.c.l.b16 %v237
        %v307 = vunpack.c.l.b16 %v238
        %v308 = vunpack.c.l.b16 %v239
        %v309 = vunpack.c.l.b16 %v240
        %v310 = vunpack.c.l.b16 %v241
        %v311 = vunpack.c.l.b16 %v242
        %v312 = vunpack.c.l.b16 %v243
        %v313 = vunpack.c.l.b16 %v244
        %v314 = vunpack.c.l.b16 %v245
        %v315 = vunpack.c.l.b16 %v246
        %v316 = vunpack.c.l.b16 %v247
        %v317 = vunpack.c.l.b16 %v248
        %v318 = vunpack.c.l.b16 %v249
        %v319 = vunpack.c.l.b16 %v250
        %v320 = vunpack.c.l.b16 %v251
        %v321 = vunpack.c.l.b16 %v252
        %v322 = vunpack.c.l.b16 %v253
        %v323 = vunpack.c.l.b16 %v254
        %v324 = vunpack.c.l.b16 %v257
        %v325 = vunpack.c.l.b16 %v258
        %v326 = vpack.c.b16 %v295, %v294
        %v327 = vpack.c.b16 %v297, %v296
        %v328 = vpack.c.b16 %v299, %v298
        %v329 = vpack.c.b16 %v301, %v300
        %v330 = vpack.c.b16 %v303, %v302
        %v331 = vpack.c.b16 %v305, %v304
        %v332 = vpack.c.b16 %v307, %v306
        %v333 = vpack.c.b16 %v309, %v308
        %v334 = vpack.c.b16 %v311, %v310
        %v335 = vpack.c.b16 %v313, %v312
        %v336 = vpack.c.b16 %v315, %v314
        %v337 = vpack.c.b16 %v317, %v316
        %v338 = vpack.c.b16 %v319, %v318
        %v339 = vpack.c.b16 %v321, %v320
        %v340 = vpack.c.b16 %v323, %v322
        %v341 = vpack.c.b16 %v325, %v324
        %v344 = vunpack.c.l.b16 %v260
        %v345 = vunpack.c.l.b16 %v261
        %v346 = vpack.c.b16 %v345, %v344
        %vm347 = vcmask 72704
        %v349 = vsel %vm347, %v326, 0
        %v352 = vsel %vm347, %v327, 0
        %v355 = vsel %vm347, %v328, 0
        %v358 = vsel %vm347, %v329, 0
        %v361 = vsel %vm347, %v330, 0
        %v364 = vsel %vm347, %v331, 0
        %v367 = vsel %vm347, %v332, 0
        %v370 = vsel %vm347, %v333, 0
        %v373 = vsel %vm347, %v334, 0
        %v376 = vsel %vm347, %v335, 0
        %v379 = vsel %vm347, %v336, 0
        %v382 = vsel %vm347, %v337, 0
        %v385 = vsel %vm347, %v338, 0
        %v388 = vsel %vm347, %v339, 0
        %v391 = vsel %vm347, %v340, 0
        %v394 = vsel %vm347, %v341, 0
        %vm396 = vcmask 1043456
        %vm397 = vcmask 1044480
        %v398 = vsel %vm396, 4294967295, 65535
        %v399 = vsel %vm397, %v398, 0
        %v401 = vand.u32 %v346, %v399
        %403 = vmatprep.subr.bf16.mxu0 0
        %404 = vmatpush1.bf16.msra.mxu0 %v401
        %405 = vmatprep.subr.bf16.mxu0 0
        %406 = vmatpush1.bf16.msra.mxu0 0
        %407 = vmatprep.subr.bf16.mxu0 0
        %408 = vmatpush1.bf16.msra.mxu0 0
        %409 = vmatprep.subr.bf16.mxu0 0
        %410 = vmatpush1.bf16.msra.mxu0 0
        %411 = vmatprep.subr.bf16.mxu0 0
        %412 = vmatpush1.bf16.msra.mxu0 0
        %413 = vmatprep.subr.bf16.mxu0 0
        %414 = vmatpush1.bf16.msra.mxu0 0
        %415 = vmatprep.subr.bf16.mxu0 0
        %416 = vmatpush1.bf16.msra.mxu0 0
        %417 = vmatprep.subr.bf16.mxu0 0
        %418 = vmatpush1.bf16.msra.mxu0 0
        %419 = vmatprep.subr.bf16.mxu0 0
        %420 = vmatpush1.bf16.msra.mxu0 0
        %421 = vmatprep.subr.bf16.mxu0 0
        %422 = vmatpush1.bf16.msra.mxu0 0
        %423 = vmatprep.subr.bf16.mxu0 0
        %424 = vmatpush1.bf16.msra.mxu0 0
        %425 = vmatprep.subr.bf16.mxu0 0
        %426 = vmatpush1.bf16.msra.mxu0 0
        %427 = vmatprep.subr.bf16.mxu0 0
        %428 = vmatpush1.bf16.msra.mxu0 0
        %429 = vmatprep.subr.bf16.mxu0 0
        %430 = vmatpush1.bf16.msra.mxu0 0
        %431 = vmatprep.subr.bf16.mxu0 0
        %432 = vmatpush1.bf16.msra.mxu0 0
        %433 = vmatprep.subr.bf16.mxu0 0
        %434 = vmatpush1.bf16.msra.mxu0 0
        %435 = vmatprep.mubr.bf16.mxu0 0
        %436 = vmatmul.mubr.bf16.gmra.mrb[0].mxu0 %v349
        %v437 = vpop.f32.mrb[0].mxu0
        %v438 = vadd.f32 0.0, %v437
        %v439 = vpop.f32.mrb[0].mxu0
        %v440 = vpop.f32.mrb[0].mxu0
        %v441 = vadd.f32 0.0, %v440
        %v442 = vpop.f32.mrb[0].mxu0
        %443 = vmatprep.mubr.bf16.mxu0 0
        %444 = vmatmul.mubr.bf16.gmra.mrb[0].mxu0 %v352
        %v445 = vpop.f32.mrb[0].mxu0
        %v446 = vadd.f32 0.0, %v445
        %v447 = vpop.f32.mrb[0].mxu0
        %v448 = vpop.f32.mrb[0].mxu0
        %v449 = vadd.f32 0.0, %v448
        %v450 = vpop.f32.mrb[0].mxu0
        %451 = vmatprep.mubr.bf16.mxu0 0
        %452 = vmatmul.mubr.bf16.gmra.mrb[0].mxu0 %v355
        %v453 = vpop.f32.mrb[0].mxu0
        %v454 = vadd.f32 0.0, %v453
        %v455 = vpop.f32.mrb[0].mxu0
        %v456 = vpop.f32.mrb[0].mxu0
        %v457 = vadd.f32 0.0, %v456
        %v458 = vpop.f32.mrb[0].mxu0
        %459 = vmatprep.mubr.bf16.mxu0 0
        %460 = vmatmul.mubr.bf16.gmra.mrb[0].mxu0 %v358
        %v461 = vpop.f32.mrb[0].mxu0
        %v462 = vadd.f32 0.0, %v461
        %v463 = vpop.f32.mrb[0].mxu0
        %v464 = vpop.f32.mrb[0].mxu0
        %v465 = vadd.f32 0.0, %v464
        %v466 = vpop.f32.mrb[0].mxu0
        %467 = vmatprep.mubr.bf16.mxu0 0
        %468 = vmatmul.mubr.bf16.gmra.mrb[0].mxu0 %v361
        %v469 = vpop.f32.mrb[0].mxu0
        %v470 = vadd.f32 0.0, %v469
        %v471 = vpop.f32.mrb[0].mxu0
        %v472 = vpop.f32.mrb[0].mxu0
        %v473 = vadd.f32 0.0, %v472
        %v474 = vpop.f32.mrb[0].mxu0
        %475 = vmatprep.mubr.bf16.mxu0 0
        %476 = vmatmul.mubr.bf16.gmra.mrb[0].mxu0 %v364
        %v477 = vpop.f32.mrb[0].mxu0
        %v478 = vadd.f32 0.0, %v477
        %v479 = vpop.f32.mrb[0].mxu0
        %v480 = vpop.f32.mrb[0].mxu0
        %v481 = vadd.f32 0.0, %v480
        %v482 = vpop.f32.mrb[0].mxu0
        %483 = vmatprep.mubr.bf16.mxu0 0
        %484 = vmatmul.mubr.bf16.gmra.mrb[0].mxu0 %v367
        %v485 = vpop.f32.mrb[0].mxu0
        %v486 = vadd.f32 0.0, %v485
        %v487 = vpop.f32.mrb[0].mxu0
        %v488 = vpop.f32.mrb[0].mxu0
        %v489 = vadd.f32 0.0, %v488
        %v490 = vpop.f32.mrb[0].mxu0
        %491 = vmatprep.mubr.bf16.mxu0 0
        %492 = vmatmul.mubr.bf16.gmra.mrb[0].mxu0 %v370
        %v493 = vpop.f32.mrb[0].mxu0
        %v494 = vadd.f32 0.0, %v493
        %v495 = vpop.f32.mrb[0].mxu0
        %v496 = vpop.f32.mrb[0].mxu0
        %v497 = vadd.f32 0.0, %v496
        %v498 = vpop.f32.mrb[0].mxu0
        %499 = vmatprep.mubr.bf16.mxu0 0
        %500 = vmatmul.mubr.bf16.gmra.mrb[0].mxu0 %v373
        %v501 = vpop.f32.mrb[0].mxu0
        %v502 = vadd.f32 0.0, %v501
        %v503 = vpop.f32.mrb[0].mxu0
        %v504 = vpop.f32.mrb[0].mxu0
        %v505 = vadd.f32 0.0, %v504
        %v506 = vpop.f32.mrb[0].mxu0
        %507 = vmatprep.mubr.bf16.mxu0 0
        %508 = vmatmul.mubr.bf16.gmra.mrb[0].mxu0 %v376
        %v509 = vpop.f32.mrb[0].mxu0
        %v510 = vadd.f32 0.0, %v509
        %v511 = vpop.f32.mrb[0].mxu0
        %v512 = vpop.f32.mrb[0].mxu0
        %v513 = vadd.f32 0.0, %v512
        %v514 = vpop.f32.mrb[0].mxu0
        %515 = vmatprep.mubr.bf16.mxu0 0
        %516 = vmatmul.mubr.bf16.gmra.mrb[0].mxu0 %v379
        %v517 = vpop.f32.mrb[0].mxu0
        %v518 = vadd.f32 0.0, %v517
        %v519 = vpop.f32.mrb[0].mxu0
        %v520 = vpop.f32.mrb[0].mxu0
        %v521 = vadd.f32 0.0, %v520
        %v522 = vpop.f32.mrb[0].mxu0
        %523 = vmatprep.mubr.bf16.mxu0 0
        %524 = vmatmul.mubr.bf16.gmra.mrb[0].mxu0 %v382
        %v525 = vpop.f32.mrb[0].mxu0
        %v526 = vadd.f32 0.0, %v525
        %v527 = vpop.f32.mrb[0].mxu0
        %v528 = vpop.f32.mrb[0].mxu0
        %v529 = vadd.f32 0.0, %v528
        %v530 = vpop.f32.mrb[0].mxu0
        %531 = vmatprep.mubr.bf16.mxu0 0
        %532 = vmatmul.mubr.bf16.gmra.mrb[0].mxu0 %v385
        %v533 = vpop.f32.mrb[0].mxu0
        %v534 = vadd.f32 0.0, %v533
        %v535 = vpop.f32.mrb[0].mxu0
        %v536 = vpop.f32.mrb[0].mxu0
        %v537 = vadd.f32 0.0, %v536
        %v538 = vpop.f32.mrb[0].mxu0
        %539 = vmatprep.mubr.bf16.mxu0 0
        %540 = vmatmul.mubr.bf16.gmra.mrb[0].mxu0 %v388
        %v541 = vpop.f32.mrb[0].mxu0
        %v542 = vadd.f32 0.0, %v541
        %v543 = vpop.f32.mrb[0].mxu0
        %v544 = vpop.f32.mrb[0].mxu0
        %v545 = vadd.f32 0.0, %v544
        %v546 = vpop.f32.mrb[0].mxu0
        %547 = vmatprep.mubr.bf16.mxu0 0
        %548 = vmatmul.mubr.bf16.gmra.mrb[0].mxu0 %v391
        %v549 = vpop.f32.mrb[0].mxu0
        %v550 = vadd.f32 0.0, %v549
        %v551 = vpop.f32.mrb[0].mxu0
        %v552 = vpop.f32.mrb[0].mxu0
        %v553 = vadd.f32 0.0, %v552
        %v554 = vpop.f32.mrb[0].mxu0
        %555 = vmatprep.mubr.bf16.mxu0 0
        %556 = vmatmul.mubr.bf16.gmra.mrb[0].mxu0 %v394
        %v557 = vpop.f32.mrb[0].mxu0
        %v558 = vadd.f32 0.0, %v557
        %v559 = vpop.f32.mrb[0].mxu0
        %v560 = vpop.f32.mrb[0].mxu0
        %v561 = vadd.f32 0.0, %v560
        %v562 = vpop.f32.mrb[0].mxu0
        %563 = vdwg.mxu0
        %v566 = vunpack.c.l.b16 %v223
        %v567 = vunpack.c.l.b16 %v224
        %v568 = vpack.c.b16 %v567, %v566
        %v571 = vunpack.c.l.b16 %v255
        %v572 = vunpack.c.l.b16 %v256
        %v573 = vpack.c.b16 %v572, %v571
        %v575 = vsel %vm347, %v568, 0
        %v578 = vand.u32 %v573, %v399
        %580 = vmatprep.subr.bf16.mxu0 0
        %581 = vmatpush1.bf16.msra.mxu0 %v578
        %582 = vmatprep.subr.bf16.mxu0 0
        %583 = vmatpush1.bf16.msra.mxu0 0
        %584 = vmatprep.subr.bf16.mxu0 0
        %585 = vmatpush1.bf16.msra.mxu0 0
        %586 = vmatprep.subr.bf16.mxu0 0
        %587 = vmatpush1.bf16.msra.mxu0 0
        %588 = vmatprep.subr.bf16.mxu0 0
        %589 = vmatpush1.bf16.msra.mxu0 0
        %590 = vmatprep.subr.bf16.mxu0 0
        %591 = vmatpush1.bf16.msra.mxu0 0
        %592 = vmatprep.subr.bf16.mxu0 0
        %593 = vmatpush1.bf16.msra.mxu0 0
        %594 = vmatprep.subr.bf16.mxu0 0
        %595 = vmatpush1.bf16.msra.mxu0 0
        %596 = vmatprep.subr.bf16.mxu0 0
        %597 = vmatpush1.bf16.msra.mxu0 0
        %598 = vmatprep.subr.bf16.mxu0 0
        %599 = vmatpush1.bf16.msra.mxu0 0
        %600 = vmatprep.subr.bf16.mxu0 0
        %601 = vmatpush1.bf16.msra.mxu0 0
        %602 = vmatprep.subr.bf16.mxu0 0
        %603 = vmatpush1.bf16.msra.mxu0 0
        %604 = vmatprep.subr.bf16.mxu0 0
        %605 = vmatpush1.bf16.msra.mxu0 0
        %606 = vmatprep.subr.bf16.mxu0 0
        %607 = vmatpush1.bf16.msra.mxu0 0
        %608 = vmatprep.subr.bf16.mxu0 0
        %609 = vmatpush1.bf16.msra.mxu0 0
        %610 = vmatprep.subr.bf16.mxu0 0
        %611 = vmatpush1.bf16.msra.mxu0 0
        %612 = vmatprep.mubr.bf16.mxu0 0
        %613 = vmatmul.mubr.bf16.gmra.mrb[0].mxu0 %v575
        %v614 = vpop.f32.mrb[0].mxu0
        %v615 = vadd.f32 %v438, %v614
        %v616 = vpop.f32.mrb[0].mxu0
        %v617 = vpop.f32.mrb[0].mxu0
        %v618 = vadd.f32 %v441, %v617
        %v619 = vpop.f32.mrb[0].mxu0
        %620 = vmatprep.mubr.bf16.mxu0 0
        %621 = vmatmul.mubr.bf16.gmra.mrb[0].mxu0 %v349
        %v622 = vpop.f32.mrb[0].mxu0
        %v623 = vadd.f32 %v446, %v622
        %v624 = vpop.f32.mrb[0].mxu0
        %v625 = vpop.f32.mrb[0].mxu0
        %v626 = vadd.f32 %v449, %v625
        %v627 = vpop.f32.mrb[0].mxu0
        %628 = vmatprep.mubr.bf16.mxu0 0
        %629 = vmatmul.mubr.bf16.gmra.mrb[0].mxu0 %v352
        %v630 = vpop.f32.mrb[0].mxu0
        %v631 = vadd.f32 %v454, %v630
        %v632 = vpop.f32.mrb[0].mxu0
        %v633 = vpop.f32.mrb[0].mxu0
        %v634 = vadd.f32 %v457, %v633
        %v635 = vpop.f32.mrb[0].mxu0
        %636 = vmatprep.mubr.bf16.mxu0 0
        %637 = vmatmul.mubr.bf16.gmra.mrb[0].mxu0 %v355
        %v638 = vpop.f32.mrb[0].mxu0
        %v639 = vadd.f32 %v462, %v638
        %v640 = vpop.f32.mrb[0].mxu0
        %v641 = vpop.f32.mrb[0].mxu0
        %v642 = vadd.f32 %v465, %v641
        %v643 = vpop.f32.mrb[0].mxu0
        %644 = vmatprep.mubr.bf16.mxu0 0
        %645 = vmatmul.mubr.bf16.gmra.mrb[0].mxu0 %v358
        %v646 = vpop.f32.mrb[0].mxu0
        %v647 = vadd.f32 %v470, %v646
        %v648 = vpop.f32.mrb[0].mxu0
        %v649 = vpop.f32.mrb[0].mxu0
        %v650 = vadd.f32 %v473, %v649
        %v651 = vpop.f32.mrb[0].mxu0
        %652 = vmatprep.mubr.bf16.mxu0 0
        %653 = vmatmul.mubr.bf16.gmra.mrb[0].mxu0 %v361
        %v654 = vpop.f32.mrb[0].mxu0
        %v655 = vadd.f32 %v478, %v654
        %v656 = vpop.f32.mrb[0].mxu0
        %v657 = vpop.f32.mrb[0].mxu0
        %v658 = vadd.f32 %v481, %v657
        %v659 = vpop.f32.mrb[0].mxu0
        %660 = vmatprep.mubr.bf16.mxu0 0
        %661 = vmatmul.mubr.bf16.gmra.mrb[0].mxu0 %v364
        %v662 = vpop.f32.mrb[0].mxu0
        %v663 = vadd.f32 %v486, %v662
        %v664 = vpop.f32.mrb[0].mxu0
        %v665 = vpop.f32.mrb[0].mxu0
        %v666 = vadd.f32 %v489, %v665
        %v667 = vpop.f32.mrb[0].mxu0
        %668 = vmatprep.mubr.bf16.mxu0 0
        %669 = vmatmul.mubr.bf16.gmra.mrb[0].mxu0 %v367
        %v670 = vpop.f32.mrb[0].mxu0
        %v671 = vadd.f32 %v494, %v670
        %v672 = vpop.f32.mrb[0].mxu0
        %v673 = vpop.f32.mrb[0].mxu0
        %v674 = vadd.f32 %v497, %v673
        %v675 = vpop.f32.mrb[0].mxu0
        %676 = vmatprep.mubr.bf16.mxu0 0
        %677 = vmatmul.mubr.bf16.gmra.mrb[0].mxu0 %v370
        %v678 = vpop.f32.mrb[0].mxu0
        %v679 = vadd.f32 %v502, %v678
        %v680 = vpop.f32.mrb[0].mxu0
        %v681 = vpop.f32.mrb[0].mxu0
        %v682 = vadd.f32 %v505, %v681
        %v683 = vpop.f32.mrb[0].mxu0
        %684 = vmatprep.mubr.bf16.mxu0 0
        %685 = vmatmul.mubr.bf16.gmra.mrb[0].mxu0 %v373
        %v686 = vpop.f32.mrb[0].mxu0
        %v687 = vadd.f32 %v510, %v686
        %v688 = vpop.f32.mrb[0].mxu0
        %v689 = vpop.f32.mrb[0].mxu0
        %v690 = vadd.f32 %v513, %v689
        %v691 = vpop.f32.mrb[0].mxu0
        %692 = vmatprep.mubr.bf16.mxu0 0
        %693 = vmatmul.mubr.bf16.gmra.mrb[0].mxu0 %v376
        %v694 = vpop.f32.mrb[0].mxu0
        %v695 = vadd.f32 %v518, %v694
        %v696 = vpop.f32.mrb[0].mxu0
        %v697 = vpop.f32.mrb[0].mxu0
        %v698 = vadd.f32 %v521, %v697
        %v699 = vpop.f32.mrb[0].mxu0
        %700 = vmatprep.mubr.bf16.mxu0 0
        %701 = vmatmul.mubr.bf16.gmra.mrb[0].mxu0 %v379
        %v702 = vpop.f32.mrb[0].mxu0
        %v703 = vadd.f32 %v526, %v702
        %v704 = vpop.f32.mrb[0].mxu0
        %v705 = vpop.f32.mrb[0].mxu0
        %v706 = vadd.f32 %v529, %v705
        %v707 = vpop.f32.mrb[0].mxu0
        %708 = vmatprep.mubr.bf16.mxu0 0
        %709 = vmatmul.mubr.bf16.gmra.mrb[0].mxu0 %v382
        %v710 = vpop.f32.mrb[0].mxu0
        %v711 = vadd.f32 %v534, %v710
        %v712 = vpop.f32.mrb[0].mxu0
        %v713 = vpop.f32.mrb[0].mxu0
        %v714 = vadd.f32 %v537, %v713
        %v715 = vpop.f32.mrb[0].mxu0
        %716 = vmatprep.mubr.bf16.mxu0 0
        %717 = vmatmul.mubr.bf16.gmra.mrb[0].mxu0 %v385
        %v718 = vpop.f32.mrb[0].mxu0
        %v719 = vadd.f32 %v542, %v718
        %v720 = vpop.f32.mrb[0].mxu0
        %v721 = vpop.f32.mrb[0].mxu0
        %v722 = vadd.f32 %v545, %v721
        %v723 = vpop.f32.mrb[0].mxu0
        %724 = vmatprep.mubr.bf16.mxu0 0
        %725 = vmatmul.mubr.bf16.gmra.mrb[0].mxu0 %v388
        %v726 = vpop.f32.mrb[0].mxu0
        %v727 = vadd.f32 %v550, %v726
        %v728 = vpop.f32.mrb[0].mxu0
        %v729 = vpop.f32.mrb[0].mxu0
        %v730 = vadd.f32 %v553, %v729
        %v731 = vpop.f32.mrb[0].mxu0
        %732 = vmatprep.mubr.bf16.mxu0 0
        %733 = vmatmul.mubr.bf16.gmra.mrb[0].mxu0 %v391
        %v734 = vpop.f32.mrb[0].mxu0
        %v735 = vadd.f32 %v558, %v734
        %v736 = vpop.f32.mrb[0].mxu0
        %v737 = vpop.f32.mrb[0].mxu0
        %v738 = vadd.f32 %v561, %v737
        %v739 = vpop.f32.mrb[0].mxu0
        %740 = vdwg.mxu0
        %v741 = vld [vmem:[%s221 + $0x10] sm:$0xf]
        %v742 = vld [vmem:[%s221 + $0x14] sm:$0xf]
        %v743 = vld [vmem:[%s221 + $0x18] sm:$0xf]
        %v744 = vld [vmem:[%s221 + $0x1c] sm:$0xf]
        %v745 = vld [vmem:[%s221 + $0x20] sm:$0xf]
        %v746 = vld [vmem:[%s221 + $0x24] sm:$0xf]
        %v747 = vld [vmem:[%s221 + $0x28] sm:$0xf]
        %v748 = vld [vmem:[%s221 + $0x2c] sm:$0xf]
        %v749 = vld [vmem:[%s221 + $0x30] sm:$0xf]
        %v750 = vld [vmem:[%s221 + $0x34] sm:$0xf]
        %v751 = vld [vmem:[%s221 + $0x38] sm:$0xf]
        %v752 = vld [vmem:[%s221 + $0x3c] sm:$0xf]
        %v753 = vld [vmem:[%s221 + $0x40] sm:$0xf]
        %v754 = vld [vmem:[%s221 + $0x44] sm:$0xf]
        %v755 = vld [vmem:[%s221 + $0x48] sm:$0xf]
        %v756 = vld [vmem:[%s221 + $0x4c] sm:$0xf]
        %v757 = vld [vmem:[%s221 + $0x50] sm:$0xf]
        %v758 = vld [vmem:[%s221 + $0x54] sm:$0xf]
        %v759 = vld [vmem:[%s221 + $0x58] sm:$0xf]
        %v760 = vld [vmem:[%s221 + $0x5c] sm:$0xf]
        %v761 = vld [vmem:[%s221 + $0x60] sm:$0xf]
        %v762 = vld [vmem:[%s221 + $0x64] sm:$0xf]
        %v763 = vld [vmem:[%s221 + $0x68] sm:$0xf]
        %v764 = vld [vmem:[%s221 + $0x6c] sm:$0xf]
        %v765 = vld [vmem:[%s221 + $0x70] sm:$0xf]
        %v766 = vld [vmem:[%s221 + $0x74] sm:$0xf]
        %v767 = vld [vmem:[%s221 + $0x78] sm:$0xf]
        %v768 = vld [vmem:[%s221 + $0x7c] sm:$0xf]
        %v769 = vld [vmem:[%s221 + $0x80] sm:$0xf]
        %v770 = vld [vmem:[%s221 + $0x84] sm:$0xf]
        %v771 = vld [vmem:[%s221 + $0x88] sm:$0xf]
        %v772 = vld [vmem:[%s221 + $0x8c] sm:$0xf]
        %s773 = scalar_lea.vmem %s1, 16
        %v774 = vld [vmem:[%s773] sm:$0xf]
        %v775 = vld [vmem:[%s773 + $0x4] sm:$0x1]
        %v808 = vunpack.c.l.b16 %v741
        %v809 = vunpack.c.l.b16 %v742
        %v810 = vunpack.c.l.b16 %v743
        %v811 = vunpack.c.l.b16 %v744
        %v812 = vunpack.c.l.b16 %v745
        %v813 = vunpack.c.l.b16 %v746
        %v814 = vunpack.c.l.b16 %v747
        %v815 = vunpack.c.l.b16 %v748
        %v816 = vunpack.c.l.b16 %v749
        %v817 = vunpack.c.l.b16 %v750
        %v818 = vunpack.c.l.b16 %v751
        %v819 = vunpack.c.l.b16 %v752
        %v820 = vunpack.c.l.b16 %v753
        %v821 = vunpack.c.l.b16 %v754
        %v822 = vunpack.c.l.b16 %v755
        %v823 = vunpack.c.l.b16 %v756
        %v824 = vunpack.c.l.b16 %v757
        %v825 = vunpack.c.l.b16 %v758
        %v826 = vunpack.c.l.b16 %v759
        %v827 = vunpack.c.l.b16 %v760
        %v828 = vunpack.c.l.b16 %v761
        %v829 = vunpack.c.l.b16 %v762
        %v830 = vunpack.c.l.b16 %v763
        %v831 = vunpack.c.l.b16 %v764
        %v832 = vunpack.c.l.b16 %v765
        %v833 = vunpack.c.l.b16 %v766
        %v834 = vunpack.c.l.b16 %v767
        %v835 = vunpack.c.l.b16 %v768
        %v836 = vunpack.c.l.b16 %v769
        %v837 = vunpack.c.l.b16 %v770
        %v838 = vunpack.c.l.b16 %v771
        %v839 = vunpack.c.l.b16 %v772
        %v840 = vpack.c.b16 %v809, %v808
        %v841 = vpack.c.b16 %v811, %v810
        %v842 = vpack.c.b16 %v813, %v812
        %v843 = vpack.c.b16 %v815, %v814
        %v844 = vpack.c.b16 %v817, %v816
        %v845 = vpack.c.b16 %v819, %v818
        %v846 = vpack.c.b16 %v821, %v820
        %v847 = vpack.c.b16 %v823, %v822
        %v848 = vpack.c.b16 %v825, %v824
        %v849 = vpack.c.b16 %v827, %v826
        %v850 = vpack.c.b16 %v829, %v828
        %v851 = vpack.c.b16 %v831, %v830
        %v852 = vpack.c.b16 %v833, %v832
        %v853 = vpack.c.b16 %v835, %v834
        %v854 = vpack.c.b16 %v837, %v836
        %v855 = vpack.c.b16 %v839, %v838
        %v858 = vunpack.c.l.b16 %v774
        %v859 = vunpack.c.l.b16 %v775
        %v860 = vpack.c.b16 %v859, %v858
        %v862 = vsel %vm347, %v840, 0
        %v865 = vsel %vm347, %v841, 0
        %v868 = vsel %vm347, %v842, 0
        %v871 = vsel %vm347, %v843, 0
        %v874 = vsel %vm347, %v844, 0
        %v877 = vsel %vm347, %v845, 0
        %v880 = vsel %vm347, %v846, 0
        %v883 = vsel %vm347, %v847, 0
        %v886 = vsel %vm347, %v848, 0
        %v889 = vsel %vm347, %v849, 0
        %v892 = vsel %vm347, %v850, 0
        %v895 = vsel %vm347, %v851, 0
        %v898 = vsel %vm347, %v852, 0
        %v901 = vsel %vm347, %v853, 0
        %v904 = vsel %vm347, %v854, 0
        %v907 = vsel %vm347, %v855, 0
        %v910 = vand.u32 %v860, %v399
        %912 = vmatprep.subr.bf16.mxu0 0
        %913 = vmatpush1.bf16.msra.mxu0 %v910
        %914 = vmatprep.subr.bf16.mxu0 0
        %915 = vmatpush1.bf16.msra.mxu0 0
        %916 = vmatprep.subr.bf16.mxu0 0
        %917 = vmatpush1.bf16.msra.mxu0 0
        %918 = vmatprep.subr.bf16.mxu0 0
        %919 = vmatpush1.bf16.msra.mxu0 0
        %920 = vmatprep.subr.bf16.mxu0 0
        %921 = vmatpush1.bf16.msra.mxu0 0
        %922 = vmatprep.subr.bf16.mxu0 0
        %923 = vmatpush1.bf16.msra.mxu0 0
        %924 = vmatprep.subr.bf16.mxu0 0
        %925 = vmatpush1.bf16.msra.mxu0 0
        %926 = vmatprep.subr.bf16.mxu0 0
        %927 = vmatpush1.bf16.msra.mxu0 0
        %928 = vmatprep.subr.bf16.mxu0 0
        %929 = vmatpush1.bf16.msra.mxu0 0
        %930 = vmatprep.subr.bf16.mxu0 0
        %931 = vmatpush1.bf16.msra.mxu0 0
        %932 = vmatprep.subr.bf16.mxu0 0
        %933 = vmatpush1.bf16.msra.mxu0 0
        %934 = vmatprep.subr.bf16.mxu0 0
        %935 = vmatpush1.bf16.msra.mxu0 0
        %936 = vmatprep.subr.bf16.mxu0 0
        %937 = vmatpush1.bf16.msra.mxu0 0
        %938 = vmatprep.subr.bf16.mxu0 0
        %939 = vmatpush1.bf16.msra.mxu0 0
        %940 = vmatprep.subr.bf16.mxu0 0
        %941 = vmatpush1.bf16.msra.mxu0 0
        %942 = vmatprep.subr.bf16.mxu0 0
        %943 = vmatpush1.bf16.msra.mxu0 0
        %944 = vmatprep.mubr.bf16.mxu0 0
        %945 = vmatmul.mubr.bf16.gmra.mrb[0].mxu0 %v862
        %v946 = vpop.f32.mrb[0].mxu0
        %v947 = vadd.f32 0.0, %v946
        %v948 = vpop.f32.mrb[0].mxu0
        %v949 = vpop.f32.mrb[0].mxu0
        %v950 = vadd.f32 0.0, %v949
        %v951 = vpop.f32.mrb[0].mxu0
        %952 = vmatprep.mubr.bf16.mxu0 0
        %953 = vmatmul.mubr.bf16.gmra.mrb[0].mxu0 %v865
        %v954 = vpop.f32.mrb[0].mxu0
        %v955 = vadd.f32 0.0, %v954
        %v956 = vpop.f32.mrb[0].mxu0
        %v957 = vpop.f32.mrb[0].mxu0
        %v958 = vadd.f32 0.0, %v957
        %v959 = vpop.f32.mrb[0].mxu0
        %960 = vmatprep.mubr.bf16.mxu0 0
        %961 = vmatmul.mubr.bf16.gmra.mrb[0].mxu0 %v868
        %v962 = vpop.f32.mrb[0].mxu0
        %v963 = vadd.f32 0.0, %v962
        %v964 = vpop.f32.mrb[0].mxu0
        %v965 = vpop.f32.mrb[0].mxu0
        %v966 = vadd.f32 0.0, %v965
        %v967 = vpop.f32.mrb[0].mxu0
        %968 = vmatprep.mubr.bf16.mxu0 0
        %969 = vmatmul.mubr.bf16.gmra.mrb[0].mxu0 %v871
        %v970 = vpop.f32.mrb[0].mxu0
        %v971 = vadd.f32 0.0, %v970
        %v972 = vpop.f32.mrb[0].mxu0
        %v973 = vpop.f32.mrb[0].mxu0
        %v974 = vadd.f32 0.0, %v973
        %v975 = vpop.f32.mrb[0].mxu0
        %976 = vmatprep.mubr.bf16.mxu0 0
        %977 = vmatmul.mubr.bf16.gmra.mrb[0].mxu0 %v874
        %v978 = vpop.f32.mrb[0].mxu0
        %v979 = vadd.f32 0.0, %v978
        %v980 = vpop.f32.mrb[0].mxu0
        %v981 = vpop.f32.mrb[0].mxu0
        %v982 = vadd.f32 0.0, %v981
        %v983 = vpop.f32.mrb[0].mxu0
        %984 = vmatprep.mubr.bf16.mxu0 0
        %985 = vmatmul.mubr.bf16.gmra.mrb[0].mxu0 %v877
        %v986 = vpop.f32.mrb[0].mxu0
        %v987 = vadd.f32 0.0, %v986
        %v988 = vpop.f32.mrb[0].mxu0
        %v989 = vpop.f32.mrb[0].mxu0
        %v990 = vadd.f32 0.0, %v989
        %v991 = vpop.f32.mrb[0].mxu0
        %992 = vmatprep.mubr.bf16.mxu0 0
        %993 = vmatmul.mubr.bf16.gmra.mrb[0].mxu0 %v880
        %v994 = vpop.f32.mrb[0].mxu0
        %v995 = vadd.f32 0.0, %v994
        %v996 = vpop.f32.mrb[0].mxu0
        %v997 = vpop.f32.mrb[0].mxu0
        %v998 = vadd.f32 0.0, %v997
        %v999 = vpop.f32.mrb[0].mxu0
        %1000 = vmatprep.mubr.bf16.mxu0 0
        %1001 = vmatmul.mubr.bf16.gmra.mrb[0].mxu0 %v883
        %v1002 = vpop.f32.mrb[0].mxu0
        %v1003 = vadd.f32 0.0, %v1002
        %v1004 = vpop.f32.mrb[0].mxu0
        %v1005 = vpop.f32.mrb[0].mxu0
        %v1006 = vadd.f32 0.0, %v1005
        %v1007 = vpop.f32.mrb[0].mxu0
        %1008 = vmatprep.mubr.bf16.mxu0 0
        %1009 = vmatmul.mubr.bf16.gmra.mrb[0].mxu0 %v886
        %v1010 = vpop.f32.mrb[0].mxu0
        %v1011 = vadd.f32 0.0, %v1010
        %v1012 = vpop.f32.mrb[0].mxu0
        %v1013 = vpop.f32.mrb[0].mxu0
        %v1014 = vadd.f32 0.0, %v1013
        %v1015 = vpop.f32.mrb[0].mxu0
        %1016 = vmatprep.mubr.bf16.mxu0 0
        %1017 = vmatmul.mubr.bf16.gmra.mrb[0].mxu0 %v889
        %v1018 = vpop.f32.mrb[0].mxu0
        %v1019 = vadd.f32 0.0, %v1018
        %v1020 = vpop.f32.mrb[0].mxu0
        %v1021 = vpop.f32.mrb[0].mxu0
        %v1022 = vadd.f32 0.0, %v1021
        %v1023 = vpop.f32.mrb[0].mxu0
        %1024 = vmatprep.mubr.bf16.mxu0 0
        %1025 = vmatmul.mubr.bf16.gmra.mrb[0].mxu0 %v892
        %v1026 = vpop.f32.mrb[0].mxu0
        %v1027 = vadd.f32 0.0, %v1026
        %v1028 = vpop.f32.mrb[0].mxu0
        %v1029 = vpop.f32.mrb[0].mxu0
        %v1030 = vadd.f32 0.0, %v1029
        %v1031 = vpop.f32.mrb[0].mxu0
        %1032 = vmatprep.mubr.bf16.mxu0 0
        %1033 = vmatmul.mubr.bf16.gmra.mrb[0].mxu0 %v895
        %v1034 = vpop.f32.mrb[0].mxu0
        %v1035 = vadd.f32 0.0, %v1034
        %v1036 = vpop.f32.mrb[0].mxu0
        %v1037 = vpop.f32.mrb[0].mxu0
        %v1038 = vadd.f32 0.0, %v1037
        %v1039 = vpop.f32.mrb[0].mxu0
        %1040 = vmatprep.mubr.bf16.mxu0 0
        %1041 = vmatmul.mubr.bf16.gmra.mrb[0].mxu0 %v898
        %v1042 = vpop.f32.mrb[0].mxu0
        %v1043 = vadd.f32 0.0, %v1042
        %v1044 = vpop.f32.mrb[0].mxu0
        %v1045 = vpop.f32.mrb[0].mxu0
        %v1046 = vadd.f32 0.0, %v1045
        %v1047 = vpop.f32.mrb[0].mxu0
        %1048 = vmatprep.mubr.bf16.mxu0 0
        %1049 = vmatmul.mubr.bf16.gmra.mrb[0].mxu0 %v901
        %v1050 = vpop.f32.mrb[0].mxu0
        %v1051 = vadd.f32 0.0, %v1050
        %v1052 = vpop.f32.mrb[0].mxu0
        %v1053 = vpop.f32.mrb[0].mxu0
        %v1054 = vadd.f32 0.0, %v1053
        %v1055 = vpop.f32.mrb[0].mxu0
        %1056 = vmatprep.mubr.bf16.mxu0 0
        %1057 = vmatmul.mubr.bf16.gmra.mrb[0].mxu0 %v904
        %v1058 = vpop.f32.mrb[0].mxu0
        %v1059 = vadd.f32 0.0, %v1058
        %v1060 = vpop.f32.mrb[0].mxu0
        %v1061 = vpop.f32.mrb[0].mxu0
        %v1062 = vadd.f32 0.0, %v1061
        %v1063 = vpop.f32.mrb[0].mxu0
        %1064 = vmatprep.mubr.bf16.mxu0 0
        %1065 = vmatmul.mubr.bf16.gmra.mrb[0].mxu0 %v907
        %v1066 = vpop.f32.mrb[0].mxu0
        %v1067 = vadd.f32 0.0, %v1066
        %v1068 = vpop.f32.mrb[0].mxu0
        %v1069 = vpop.f32.mrb[0].mxu0
        %v1070 = vadd.f32 0.0, %v1069
        %v1071 = vpop.f32.mrb[0].mxu0
        %1072 = vdwg.mxu0
        %v1073 = vadd.f32 %v615, %v947
        %v1074 = vadd.f32 %v618, %v950
        %v1075 = vadd.f32 %v623, %v955
        %v1076 = vadd.f32 %v626, %v958
        %v1077 = vadd.f32 %v631, %v963
        %v1078 = vadd.f32 %v634, %v966
        %v1079 = vadd.f32 %v639, %v971
        %v1080 = vadd.f32 %v642, %v974
        %v1081 = vadd.f32 %v647, %v979
        %v1082 = vadd.f32 %v650, %v982
        %v1083 = vadd.f32 %v655, %v987
        %v1084 = vadd.f32 %v658, %v990
        %v1085 = vadd.f32 %v663, %v995
        %v1086 = vadd.f32 %v666, %v998
        %v1087 = vadd.f32 %v671, %v1003
        %v1088 = vadd.f32 %v674, %v1006
        %v1089 = vadd.f32 %v679, %v1011
        %v1090 = vadd.f32 %v682, %v1014
        %v1091 = vadd.f32 %v687, %v1019
        %v1092 = vadd.f32 %v690, %v1022
        %v1093 = vadd.f32 %v695, %v1027
        %v1094 = vadd.f32 %v698, %v1030
        %v1095 = vadd.f32 %v703, %v1035
        %v1096 = vadd.f32 %v706, %v1038
        %v1097 = vadd.f32 %v711, %v1043
        %v1098 = vadd.f32 %v714, %v1046
        %v1099 = vadd.f32 %v719, %v1051
        %v1100 = vadd.f32 %v722, %v1054
        %v1101 = vadd.f32 %v727, %v1059
        %v1102 = vadd.f32 %v730, %v1062
        %v1103 = vadd.f32 %v735, %v1067
        %v1104 = vadd.f32 %v738, %v1070
        %v1105 = vld [vmem:[%s2] sm:$0x1]
        %v1107 = vlaneseq
        %v1108 = vshrl.u32 %v1107, 7
        %v1109 = vsub.s32 0, %v1108
        %v1110 = vrot.slane %v1105, %v1109
        %v1112 = vadd.f32 %v1073, %v1110
        %v1113 = vadd.f32 %v1074, %v1110
        %v1114 = vadd.f32 %v1075, %v1110
        %v1115 = vadd.f32 %v1076, %v1110
        %v1116 = vadd.f32 %v1077, %v1110
        %v1117 = vadd.f32 %v1078, %v1110
        %v1118 = vadd.f32 %v1079, %v1110
        %v1119 = vadd.f32 %v1080, %v1110
        %v1120 = vadd.f32 %v1081, %v1110
        %v1121 = vadd.f32 %v1082, %v1110
        %v1122 = vadd.f32 %v1083, %v1110
        %v1123 = vadd.f32 %v1084, %v1110
        %v1124 = vadd.f32 %v1085, %v1110
        %v1125 = vadd.f32 %v1086, %v1110
        %v1126 = vadd.f32 %v1087, %v1110
        %v1127 = vadd.f32 %v1088, %v1110
        %v1128 = vadd.f32 %v1089, %v1110
        %v1129 = vadd.f32 %v1090, %v1110
        %v1130 = vadd.f32 %v1091, %v1110
        %v1131 = vadd.f32 %v1092, %v1110
        %v1132 = vadd.f32 %v1093, %v1110
        %v1133 = vadd.f32 %v1094, %v1110
        %v1134 = vadd.f32 %v1095, %v1110
        %v1135 = vadd.f32 %v1096, %v1110
        %v1136 = vadd.f32 %v1097, %v1110
        %v1137 = vadd.f32 %v1098, %v1110
        %v1138 = vadd.f32 %v1099, %v1110
        %v1139 = vadd.f32 %v1100, %v1110
        %v1140 = vadd.f32 %v1101, %v1110
        %v1141 = vadd.f32 %v1102, %v1110
        %v1142 = vadd.f32 %v1103, %v1110
        %v1143 = vadd.f32 %v1104, %v1110
        %v1144 = vmax.f32 %v1112, 0.0
        %v1145 = vmax.f32 %v1113, 0.0
        %v1146 = vmax.f32 %v1114, 0.0
        %v1147 = vmax.f32 %v1115, 0.0
        %v1148 = vmax.f32 %v1116, 0.0
        %v1149 = vmax.f32 %v1117, 0.0
        %v1150 = vmax.f32 %v1118, 0.0
        %v1151 = vmax.f32 %v1119, 0.0
        %v1152 = vmax.f32 %v1120, 0.0
        %v1153 = vmax.f32 %v1121, 0.0
        %v1154 = vmax.f32 %v1122, 0.0
        %v1155 = vmax.f32 %v1123, 0.0
        %v1156 = vmax.f32 %v1124, 0.0
        %v1157 = vmax.f32 %v1125, 0.0
        %v1158 = vmax.f32 %v1126, 0.0
        %v1159 = vmax.f32 %v1127, 0.0
        %v1160 = vmax.f32 %v1128, 0.0
        %v1161 = vmax.f32 %v1129, 0.0
        %v1162 = vmax.f32 %v1130, 0.0
        %v1163 = vmax.f32 %v1131, 0.0
        %v1164 = vmax.f32 %v1132, 0.0
        %v1165 = vmax.f32 %v1133, 0.0
        %v1166 = vmax.f32 %v1134, 0.0
        %v1167 = vmax.f32 %v1135, 0.0
        %v1168 = vmax.f32 %v1136, 0.0
        %v1169 = vmax.f32 %v1137, 0.0
        %v1170 = vmax.f32 %v1138, 0.0
        %v1171 = vmax.f32 %v1139, 0.0
        %v1172 = vmax.f32 %v1140, 0.0
        %v1173 = vmax.f32 %v1141, 0.0
        %v1174 = vmax.f32 %v1142, 0.0
        %v1175 = vmax.f32 %v1143, 0.0
        %vm1176 = vcmask 523264
        %v1177 = vsel %vm1176, %v1144, 0.0
        %v1178 = vsel %vm1176, %v1145, 0.0
        %v1179 = vadd.f32 %v1177, %v1178
        %v1180 = vsel %vm1176, %v1146, 0.0
        %v1181 = vadd.f32 %v1179, %v1180
        %v1182 = vsel %vm1176, %v1147, 0.0
        %v1183 = vadd.f32 %v1181, %v1182
        %v1184 = vsel %vm1176, %v1148, 0.0
        %v1185 = vadd.f32 %v1183, %v1184
        %v1186 = vsel %vm1176, %v1149, 0.0
        %v1187 = vadd.f32 %v1185, %v1186
        %v1188 = vsel %vm1176, %v1150, 0.0
        %v1189 = vadd.f32 %v1187, %v1188
        %v1190 = vsel %vm1176, %v1151, 0.0
        %v1191 = vadd.f32 %v1189, %v1190
        %v1192 = vsel %vm1176, %v1152, 0.0
        %v1193 = vadd.f32 %v1191, %v1192
        %v1194 = vsel %vm1176, %v1153, 0.0
        %v1195 = vadd.f32 %v1193, %v1194
        %v1196 = vsel %vm1176, %v1154, 0.0
        %v1197 = vadd.f32 %v1195, %v1196
        %v1198 = vsel %vm1176, %v1155, 0.0
        %v1199 = vadd.f32 %v1197, %v1198
        %v1200 = vsel %vm1176, %v1156, 0.0
        %v1201 = vadd.f32 %v1199, %v1200
        %v1202 = vsel %vm1176, %v1157, 0.0
        %v1203 = vadd.f32 %v1201, %v1202
        %v1204 = vsel %vm1176, %v1158, 0.0
        %v1205 = vadd.f32 %v1203, %v1204
        %v1206 = vsel %vm1176, %v1159, 0.0
        %v1207 = vadd.f32 %v1205, %v1206
        %v1208 = vsel %vm1176, %v1160, 0.0
        %v1209 = vadd.f32 %v1207, %v1208
        %v1210 = vsel %vm1176, %v1161, 0.0
        %v1211 = vadd.f32 %v1209, %v1210
        %v1212 = vsel %vm1176, %v1162, 0.0
        %v1213 = vadd.f32 %v1211, %v1212
        %v1214 = vsel %vm1176, %v1163, 0.0
        %v1215 = vadd.f32 %v1213, %v1214
        %v1216 = vsel %vm1176, %v1164, 0.0
        %v1217 = vadd.f32 %v1215, %v1216
        %v1218 = vsel %vm1176, %v1165, 0.0
        %v1219 = vadd.f32 %v1217, %v1218
        %v1220 = vsel %vm1176, %v1166, 0.0
        %v1221 = vadd.f32 %v1219, %v1220
        %v1222 = vsel %vm1176, %v1167, 0.0
        %v1223 = vadd.f32 %v1221, %v1222
        %v1224 = vsel %vm1176, %v1168, 0.0
        %v1225 = vadd.f32 %v1223, %v1224
        %v1226 = vsel %vm1176, %v1169, 0.0
        %v1227 = vadd.f32 %v1225, %v1226
        %v1228 = vsel %vm1176, %v1170, 0.0
        %v1229 = vadd.f32 %v1227, %v1228
        %v1230 = vsel %vm1176, %v1171, 0.0
        %v1231 = vadd.f32 %v1229, %v1230
        %v1232 = vsel %vm1176, %v1172, 0.0
        %v1233 = vadd.f32 %v1231, %v1232
        %v1234 = vsel %vm1176, %v1173, 0.0
        %v1235 = vadd.f32 %v1233, %v1234
        %v1236 = vsel %vm1176, %v1174, 0.0
        %v1237 = vadd.f32 %v1235, %v1236
        %v1238 = vsel %vm1176, %v1175, 0.0
        %v1239 = vadd.f32 %v1237, %v1238
        %v1240 = vrot.slane %v1239, 4
        %v1241 = vadd.f32 %v1239, %v1240
        %v1242 = vrot.slane %v1241, 2
        %v1243 = vadd.f32 %v1241, %v1242
        %v1244 = vrot.slane %v1243, 1
        %v1245 = vadd.f32 %v1243, %v1244
        %v1246 = vmul.f32 %v1245, 0.00390625
        %v1247 = vpack.c.bf16 %v1246, %v1246
        %v1248 = vld [vmem:[%s3] sm:$0xf]
        %v1249 = vld [vmem:[%s3 + $0x4] sm:$0xf]
        %v1250 = vld [vmem:[%s3 + $0x8] sm:$0xf]
        %v1251 = vld [vmem:[%s3 + $0xc] sm:$0xf]
        %v1252 = vld [vmem:[%s3 + $0x10] sm:$0xf]
        %v1253 = vld [vmem:[%s3 + $0x14] sm:$0xf]
        %v1254 = vld [vmem:[%s3 + $0x18] sm:$0xf]
        %v1255 = vld [vmem:[%s3 + $0x1c] sm:$0xf]
        %v1256 = vld [vmem:[%s4] sm:$0x1]
        %v1265 = vunpack.c.l.b16 %v1248
        %v1266 = vunpack.c.l.b16 %v1249
        %v1267 = vunpack.c.l.b16 %v1250
        %v1268 = vunpack.c.l.b16 %v1251
        %v1269 = vunpack.c.l.b16 %v1252
        %v1270 = vunpack.c.l.b16 %v1253
        %v1271 = vunpack.c.l.b16 %v1254
        %v1272 = vunpack.c.l.b16 %v1255
        %v1273 = vpack.c.b16 %v1266, %v1265
        %v1274 = vpack.c.b16 %v1268, %v1267
        %v1275 = vpack.c.b16 %v1270, %v1269
        %v1276 = vpack.c.b16 %v1272, %v1271
        %v1282 = vsel %vm1176, %v1247, 0
        %1284 = vmatprep.subr.bf16.mxu0 0
        %1285 = vmatpush1.bf16.msra.mxu0 %v1273
        %1286 = vmatprep.subr.bf16.mxu0 0
        %1287 = vmatpush1.bf16.msra.mxu0 %v1274
        %1288 = vmatprep.subr.bf16.mxu0 0
        %1289 = vmatpush1.bf16.msra.mxu0 %v1275
        %1290 = vmatprep.subr.bf16.mxu0 0
        %1291 = vmatpush1.bf16.msra.mxu0 %v1276
        %1292 = vmatprep.subr.bf16.mxu0 0
        %1293 = vmatpush1.bf16.msra.mxu0 0
        %1294 = vmatprep.subr.bf16.mxu0 0
        %1295 = vmatpush1.bf16.msra.mxu0 0
        %1296 = vmatprep.subr.bf16.mxu0 0
        %1297 = vmatpush1.bf16.msra.mxu0 0
        %1298 = vmatprep.subr.bf16.mxu0 0
        %1299 = vmatpush1.bf16.msra.mxu0 0
        %1300 = vmatprep.subr.bf16.mxu0 0
        %1301 = vmatpush1.bf16.msra.mxu0 0
        %1302 = vmatprep.subr.bf16.mxu0 0
        %1303 = vmatpush1.bf16.msra.mxu0 0
        %1304 = vmatprep.subr.bf16.mxu0 0
        %1305 = vmatpush1.bf16.msra.mxu0 0
        %1306 = vmatprep.subr.bf16.mxu0 0
        %1307 = vmatpush1.bf16.msra.mxu0 0
        %1308 = vmatprep.subr.bf16.mxu0 0
        %1309 = vmatpush1.bf16.msra.mxu0 0
        %1310 = vmatprep.subr.bf16.mxu0 0
        %1311 = vmatpush1.bf16.msra.mxu0 0
        %1312 = vmatprep.subr.bf16.mxu0 0
        %1313 = vmatpush1.bf16.msra.mxu0 0
        %1314 = vmatprep.subr.bf16.mxu0 0
        %1315 = vmatpush1.bf16.msra.mxu0 0
        %1316 = vmatprep.mubr.bf16.mxu0 0
        %1317 = vmatmul.mubr.bf16.gmra.mrb[0].mxu0 %v1282
        %v1318 = vpop.f32.mrb[0].mxu0
        %v1319 = vadd.f32 %v1256, %v1318
        %v1320 = vpop.f32.mrb[0].mxu0
        %v1321 = vpop.f32.mrb[0].mxu0
        %v1322 = vpop.f32.mrb[0].mxu0
        %1323 = vdwg.mxu0
        %1324 = vst [vmem:[%s216] sm:$0x1] %v1319
        %s1325 = sand.u32 %s137, 1
        %s1326 = scalar_lea.sflag [#allocation3], %s1325
        %s1327 = sand.u32 %s137, 1
        %s1328 = scalar_lea.vmem [#allocation2], %s1327
        // Predicated region
        $region41: #{tpu_custom_call.1} parent=39 // pred_check
          %p1329 = pneg %p147
        $region42: #{tpu_custom_call.1} parent=39 // pred_check_branch
          %1331 = sbr.rel (%p1329) target = $region44
        $region43: #{tpu_custom_call.1} parent=39 // pred_region
          %s1333 = ssub.s32 16, 16
          %1334 = vsyncadd %s1326, %s1333
          %s1335 = smul.addr %s19, 16
          %s1336 = scalar_lea.hbm %s5, %s1335
          %s1338 = sshll.u32 %s1328, 4
          %s1339 = int_to_ptr.vmem [resolvable:$true] %s1338
          %1341 = dma.vmem_to_hbm [thread:$0]  %s1339, 16, %s1336, %s1326
        $region44: #{tpu_custom_call.1} parent=39 // pred_fallthru
          _
      $region40: #{tpu_custom_call.1} parent=5 // pred_fallthru
        _
      %p1342 = scmp.le.s32.totalorder 2, %s14
      // Predicated region
      $region45: #{tpu_custom_call.1} parent=5 // pred_check
        %p1343 = pneg %p1342
      $region46: #{tpu_custom_call.1} parent=5 // pred_check_branch
        %1345 = sbr.rel (%p1343) target = $region48
      $region47: #{tpu_custom_call.1} parent=5 // pred_region
        %s1346 = ssub.s32 %s14, 2
        // Predicated region
        $region49: #{tpu_custom_call.1} parent=47 // pred_check
          %p1347 = pneg %p153
        $region50: #{tpu_custom_call.1} parent=47 // pred_check_branch
          %1349 = sbr.rel (%p1347) target = $region52
        $region51: #{tpu_custom_call.1} parent=47 // pred_region
          %s1350 = sand.u32 %s138, 1
          %s1351 = scalar_lea.sflag [#allocation3], %s1350
          %s1352 = sand.u32 %s138, 1
          %s1353 = scalar_lea.vmem [#allocation2], %s1352
          %1354 = dma.done %s1351, 16
        $region52: #{tpu_custom_call.1} parent=47 // pred_fallthru
          _
      $region48: #{tpu_custom_call.1} parent=5 // pred_fallthru
        _
    $region6: #{tpu_custom_call.1} parent=1 // loop_footer
      %s18 = sadd.s32 1, %s14
    $region7: #{tpu_custom_call.1} parent=1 // loop_footer_branch
      %13 = sbr.rel target = $region3
    $region8: #{tpu_custom_call.1} parent=1 // loop_exit
      _
    %1355 = vsyncpa [#allocation3], 1
    %s1356 = scalar_lea.sflag [#allocation3], 1
    %1357 = vsyncpa %s1356, 1

</llo_original>
